<compile_context>
chip_gen: v7x
topology: tpu7x:2x2x1
jax: 0.10.0
libtpu: 0.0.40
codegen_flags: <defaults>
</compile_context>

<pallas_src>
import math
import functools

import jax
import jax.numpy as jnp
from jax.experimental import pallas as pl
from jax.experimental.pallas import tpu as pltpu


_SQRT_2_OVER_PI = math.sqrt(2.0 / math.pi)


def _gelu_tanh(x):
    # tanh-form GELU: transcendental lands on the EUP bundle slot instead of a long VALU
    # erf polynomial.  Equivalent to torch.nn.GELU(approximate='tanh').
    return 0.5 * x * (1.0 + jnp.tanh(_SQRT_2_OVER_PI * (x + 0.044715 * x * x * x)))


# ---------------------------------------------------------------------------
# Pallas kernel: one batch's full sequence per grid step.
# ---------------------------------------------------------------------------
def encoder_kernel(x_ref, wqkv_ref, bqkv_ref, wp_ref, bp_ref,
                   w1_ref, b1_ref, w2_ref, b2_ref, o_ref,
                   *, num_heads, d_h, compute_dtype):
    f32 = jnp.float32
    cdt = compute_dtype
    n, D = x_ref.shape

    def mm(a, w):
        # 2-D matmul; operands cast to the MXU operand dtype (bf16 default), f32 accumulate.
        return jnp.dot(a.astype(cdt), w.astype(cdt), preferred_element_type=f32)

    def qkt(a, b):
        # contract the LAST dims of both operands (Q K^T without an explicit transpose).
        return jax.lax.dot_general(a.astype(cdt), b.astype(cdt),
                                   (((1,), (1,)), ((), ())),
                                   preferred_element_type=f32)

    def ln_norm(v, eps=1e-5):
        # gamma/beta already folded into the downstream weights -> normalization only,
        # one-pass statistics (E[x^2] - E[x]^2).
        mu = jnp.mean(v, axis=-1, keepdims=True)
        msq = jnp.mean(v * v, axis=-1, keepdims=True)
        return (v - mu) * jax.lax.rsqrt(msq - mu * mu + eps)

    x = x_ref[...].astype(f32)                               # (N, D)

    # ---------------- branch 1: X + MSA(LN1(X)) ----------------
    xn1 = ln_norm(x)
    qkv = mm(xn1, wqkv_ref[...]) + bqkv_ref[...]             # (N, 3D), one fused MXU pass

    scale = 1.0 / math.sqrt(d_h)
    acc = jnp.zeros((n, D), f32)
    for h in range(num_heads):                               # static unroll (num_heads small)
        lo = h * d_h
        qh = qkv[:, lo:lo + d_h]
        kh = qkv[:, D + lo:D + lo + d_h]
        vh = qkv[:, 2 * D + lo:2 * D + lo + d_h]
        s = qkt(qh, kh) * scale                              # (N, N)
        s = s - jnp.max(s, axis=-1, keepdims=True)
        p = jnp.exp(s)                                       # f32 exp (v5e EUP has no bf16)
        a = p * pl.reciprocal(jnp.sum(p, axis=-1, keepdims=True), approx=True)
        oh = mm(a, vh)                                       # (N, d_h)
        # per-head output-projection accumulation: replaces the cat scratch + masked
        # lane-partial stores; Wp row slice is sublane-aligned (d_h multiple of 8 here).
        acc = acc + mm(oh, wp_ref[lo:lo + d_h, :])
    out1 = x + acc + bp_ref[...]                             # residual 1

    # ---- branch 2: out1 + MLP(LN2(X)) -- LN2 applied to the ORIGINAL X (as in torch) ----
    xn2 = ln_norm(x)
    h1 = _gelu_tanh(mm(xn2, w1_ref[...]) + b1_ref[...])      # (N, H)
    # TODO(synk): nn.Dropout(p=0.5) treated as identity (eval-mode semantics).
    mlp = mm(h1, w2_ref[...]) + b2_ref[...]                  # (N, D)

    o_ref[...] = (out1 + mlp).astype(o_ref.dtype)            # residual 2, explicit cast


# ---------------------------------------------------------------------------
# Wrapper: fold LN params into weights, fuse QKV, build grid over batch.
# ---------------------------------------------------------------------------
def transformer_encoder(x, params, num_heads, *, compute_dtype=jnp.bfloat16):
    B, N, D = x.shape
    d_h = D // num_heads
    H = params["w1"].shape[1]
    BN = B * N
    f32 = jnp.float32

    # Fuse Q/K/V weights into one (D, 3D) matrix and fold LN1 gamma/beta into it.
    wqkv = jnp.concatenate([params["wq"], params["wk"], params["wv"]], axis=1)   # (D, 3D)
    bqkv = jnp.concatenate([params["bq"], params["bk"], params["bv"]], axis=1)   # (1, 3D)
    g1 = params["g1"].reshape(D, 1)
    wqkv_f = (g1 * wqkv).astype(f32)
    bqkv_f = (bqkv + params["b1"] @ wqkv).astype(f32)
    # Fold LN2 gamma/beta into fc1.
    g2 = params["g2"].reshape(D, 1)
    w1_f = (g2 * params["w1"]).astype(f32)
    b1_f = (params["bb1"] + params["b2"] @ params["w1"]).astype(f32)

    x2 = x.reshape(BN, D)

    kernel = functools.partial(encoder_kernel, num_heads=num_heads, d_h=d_h,
                               compute_dtype=compute_dtype)

    rows = lambda b: (b, 0)       # per-batch row block of x / out
    const = lambda b: (0, 0)      # weights: same block every step -> fetched once

    in_specs = [
        pl.BlockSpec((N, D), rows),            # x  (one batch's sequence)
        pl.BlockSpec((D, 3 * D), const),       # fused QKV weight (LN1 folded)
        pl.BlockSpec((1, 3 * D), const),       # fused QKV bias
        pl.BlockSpec((D, D), const),           # output projection weight
        pl.BlockSpec((1, D), const),           # output projection bias
        pl.BlockSpec((D, H), const),           # fc1 weight (LN2 folded)
        pl.BlockSpec((1, H), const),           # fc1 bias
        pl.BlockSpec((H, D), const),           # fc2 weight
        pl.BlockSpec((1, D), const),           # fc2 bias
    ]
    out_specs = pl.BlockSpec((N, D), rows)

    # Advisory cost estimate so XLA schedules the custom call sensibly.
    flops = int(2 * BN * D * 3 * D + 4 * B * N * N * D + 2 * BN * D * D + 4 * BN * D * H)
    transcendentals = int(B * num_heads * N * N + BN * H + 2 * BN + B * num_heads * N)
    bytes_accessed = int(4 * (BN * D * 2 + wqkv.size + bqkv.size + D * D + D
                              + D * H + H + H * D + D))

    out2 = pl.pallas_call(
        kernel,
        grid=(B,),
        in_specs=in_specs,
        out_specs=out_specs,
        out_shape=jax.ShapeDtypeStruct((BN, D), x.dtype),
        compiler_params=pltpu.CompilerParams(
            dimension_semantics=("parallel",),          # megacore / v7x 2-TC sharding
            vmem_limit_bytes=32 * 1024 * 1024),
        cost_estimate=pl.CostEstimate(flops=flops,
                                      transcendentals=transcendentals,
                                      bytes_accessed=bytes_accessed),
    )(x2, wqkv_f, bqkv_f, params["wp"], params["bp"], w1_f, b1_f,
      params["w2"], params["bb2"])
    return out2.reshape(B, N, D)


# ---------------------------------------------------------------------------
# Pure-JAX references (unfused params; gelu_fn selects exact-erf vs tanh GELU)
# ---------------------------------------------------------------------------
def reference(x, params, num_heads, gelu_fn):
    D = x.shape[-1]
    d_h = D // num_heads

    def ln(v, g, b):
        mu = jnp.mean(v, axis=-1, keepdims=True)
        var = jnp.mean((v - mu) ** 2, axis=-1, keepdims=True)
        return (v - mu) / jnp.sqrt(var + 1e-5) * g + b

    ln1 = ln(x, params["g1"], params["b1"])
    q = ln1 @ params["wq"] + params["bq"]
    k = ln1 @ params["wk"] + params["bk"]
    v = ln1 @ params["wv"] + params["bv"]
    outs = []
    for h in range(num_heads):
        sl = slice(h * d_h, (h + 1) * d_h)
        s = jnp.einsum("bnd,bmd->bnm", q[..., sl], k[..., sl]) / math.sqrt(d_h)
        a = jax.nn.softmax(s, axis=-1)
        outs.append(jnp.einsum("bnm,bmd->bnd", a, v[..., sl]))
    cat = jnp.concatenate(outs, axis=-1)
    msa = cat @ params["wp"] + params["bp"]
    out1 = x + msa
    ln2 = ln(x, params["g2"], params["b2"])
    h1 = gelu_fn(ln2 @ params["w1"] + params["bb1"])
    mlp = h1 @ params["w2"] + params["bb2"]
    return out1 + mlp


if __name__ == "__main__":
    B, N, D = 2, 8, 32          # batch, sequence, hidden_size
    num_heads = 4               # D_h = 8
    mlp_expansion = 2
    H = mlp_expansion * D

    key = jax.random.PRNGKey(0)
    ks = jax.random.split(key, 17)
    sD = 1.0 / math.sqrt(D)
    sH = 1.0 / math.sqrt(H)

    params = {
        "g1": 1.0 + 0.1 * jax.random.normal(ks[0], (1, D), jnp.float32),
        "b1": 0.1 * jax.random.normal(ks[1], (1, D), jnp.float32),
        "wq": sD * jax.random.normal(ks[2], (D, D), jnp.float32),
        "bq": sD * jax.random.normal(ks[3], (1, D), jnp.float32),
        "wk": sD * jax.random.normal(ks[4], (D, D), jnp.float32),
        "bk": sD * jax.random.normal(ks[5], (1, D), jnp.float32),
        "wv": sD * jax.random.normal(ks[6], (D, D), jnp.float32),
        "bv": sD * jax.random.normal(ks[7], (1, D), jnp.float32),
        "wp": sD * jax.random.normal(ks[8], (D, D), jnp.float32),
        "bp": sD * jax.random.normal(ks[9], (1, D), jnp.float32),
        "g2": 1.0 + 0.1 * jax.random.normal(ks[10], (1, D), jnp.float32),
        "b2": 0.1 * jax.random.normal(ks[11], (1, D), jnp.float32),
        "w1": sD * jax.random.normal(ks[12], (D, H), jnp.float32),
        "bb1": sD * jax.random.normal(ks[13], (1, H), jnp.float32),
        "w2": sH * jax.random.normal(ks[14], (H, D), jnp.float32),
        "bb2": sH * jax.random.normal(ks[15], (1, D), jnp.float32),
    }
    x = jax.random.normal(ks[16], (B, N, D), jnp.float32)

    ref_exact = reference(x, params, num_heads,
                          lambda v: jax.nn.gelu(v, approximate=False))  # PyTorch nn.GELU()
    ref_tanh = reference(x, params, num_heads, _gelu_tanh)              # matching-approx ref

    # f32 MXU-operand path: tight structural check against the matching-approximation
    # reference (isolates real kernel bugs from the documented GELU/reciprocal approx).
    out_f32 = jax.block_until_ready(
        transformer_encoder(x, params, num_heads, compute_dtype=jnp.float32))
    assert out_f32.shape == (B, N, D)
    err_t = float(jnp.max(jnp.abs(out_f32 - ref_tanh)))
    assert jnp.allclose(out_f32, ref_tanh, atol=5e-3, rtol=5e-3), err_t
    # Against exact module semantics (erf GELU, exact softmax division): tanh-GELU +
    # approx-reciprocal deviation measured ~5e-3 max on this block -> 2e-2 budget.
    err_e = float(jnp.max(jnp.abs(out_f32 - ref_exact)))
    assert jnp.allclose(out_f32, ref_exact, atol=2e-2, rtol=2e-2), err_e

    # Default path = bf16 MXU operands with f32 accumulation (fast path on every TPU
    # generation): loose smoke check, operands rounded to 8-bit mantissa.
    out_bf16 = jax.block_until_ready(transformer_encoder(x, params, num_heads))
    err_b = float(jnp.max(jnp.abs(out_bf16 - ref_exact)))
    assert jnp.allclose(out_bf16, ref_exact, atol=1e-1, rtol=1e-1), err_b

    print("KERNEL_OK")
</pallas_src>

<mosaic_0001>
module attributes {stable_mosaic.version = 11 : i64} {
  func.func @encoder_kernel(%arg0: i32, %arg1: memref<8x32xf32, #tpu.memory_space<vmem>>, %arg2: memref<32x96xf32, #tpu.memory_space<vmem>>, %arg3: memref<1x96xf32, #tpu.memory_space<vmem>>, %arg4: memref<32x32xf32, #tpu.memory_space<vmem>>, %arg5: memref<1x32xf32, #tpu.memory_space<vmem>>, %arg6: memref<32x64xf32, #tpu.memory_space<vmem>>, %arg7: memref<1x64xf32, #tpu.memory_space<vmem>>, %arg8: memref<64x32xf32, #tpu.memory_space<vmem>>, %arg9: memref<1x32xf32, #tpu.memory_space<vmem>>, %arg10: memref<8x32xf32, #tpu.memory_space<vmem>>) attributes {dimension_semantics = [#tpu.dimension_semantics<parallel>], iteration_bounds = array<i64: 2>, scalar_prefetch = 0 : i64, scratch_operands = 0 : i64, tpu.core_type = #tpu.core_type<tc>, window_params = [{transform_indices = @transform_0, window_bounds = array<i64: 8, 32>}, {pipeline_mode = #tpu.pipeline_mode<synchronous>, transform_indices = @transform_1, window_bounds = array<i64: 32, 96>}, {pipeline_mode = #tpu.pipeline_mode<synchronous>, transform_indices = @transform_2, window_bounds = array<i64: 1, 96>}, {pipeline_mode = #tpu.pipeline_mode<synchronous>, transform_indices = @transform_3, window_bounds = array<i64: 32, 32>}, {pipeline_mode = #tpu.pipeline_mode<synchronous>, transform_indices = @transform_4, window_bounds = array<i64: 1, 32>}, {pipeline_mode = #tpu.pipeline_mode<synchronous>, transform_indices = @transform_5, window_bounds = array<i64: 32, 64>}, {pipeline_mode = #tpu.pipeline_mode<synchronous>, transform_indices = @transform_6, window_bounds = array<i64: 1, 64>}, {pipeline_mode = #tpu.pipeline_mode<synchronous>, transform_indices = @transform_7, window_bounds = array<i64: 64, 32>}, {pipeline_mode = #tpu.pipeline_mode<synchronous>, transform_indices = @transform_8, window_bounds = array<i64: 1, 32>}, {transform_indices = @transform_9, window_bounds = array<i64: 8, 32>}]} {
    %c0 = arith.constant 0 : index
    %c0_0 = arith.constant 0 : index
    %0 = vector.load %arg1[%c0, %c0_0] : memref<8x32xf32, #tpu.memory_space<vmem>>, vector<8x32xf32>
    %cst = arith.constant dense<0.000000e+00> : vector<8xf32>
    %1 = vector.multi_reduction <add>, %0, %cst [1] : vector<8x32xf32> to vector<8xf32>
    %2 = vector.shape_cast %1 : vector<8xf32> to vector<8x1xf32>
    %cst_1 = arith.constant 3.200000e+01 : f32
    %3 = vector.broadcast %cst_1 : f32 to vector<8x1xf32>
    %4 = arith.divf %2, %3 : vector<8x1xf32>
    %5 = arith.mulf %0, %0 : vector<8x32xf32>
    %cst_2 = arith.constant dense<0.000000e+00> : vector<8xf32>
    %6 = vector.multi_reduction <add>, %5, %cst_2 [1] : vector<8x32xf32> to vector<8xf32>
    %7 = vector.shape_cast %6 : vector<8xf32> to vector<8x1xf32>
    %cst_3 = arith.constant 3.200000e+01 : f32
    %8 = vector.broadcast %cst_3 : f32 to vector<8x1xf32>
    %9 = arith.divf %7, %8 : vector<8x1xf32>
    %10 = vector.broadcast %4 : vector<8x1xf32> to vector<8x32xf32>
    %11 = arith.subf %0, %10 : vector<8x32xf32>
    %12 = arith.mulf %4, %4 : vector<8x1xf32>
    %13 = arith.subf %9, %12 : vector<8x1xf32>
    %cst_4 = arith.constant 9.99999974E-6 : f32
    %14 = vector.broadcast %cst_4 : f32 to vector<8x1xf32>
    %15 = arith.addf %13, %14 : vector<8x1xf32>
    %16 = math.rsqrt %15 : vector<8x1xf32>
    %17 = vector.broadcast %16 : vector<8x1xf32> to vector<8x32xf32>
    %18 = arith.mulf %11, %17 : vector<8x32xf32>
    %c0_5 = arith.constant 0 : index
    %c0_6 = arith.constant 0 : index
    %19 = vector.load %arg2[%c0_5, %c0_6] : memref<32x96xf32, #tpu.memory_space<vmem>>, vector<32x96xf32>
    %cst_7 = arith.constant dense<0.000000e+00> : vector<8x96xf32>
    %20 = tpu.matmul %18, %19, %cst_7 {dimension_numbers = #tpu.dot_dimension_numbers<[1], [0], [0], [1], [0, 0, 1, 1], [], []>} : vector<8x32xf32>, vector<32x96xf32>, vector<8x96xf32> -> vector<8x96xf32>
    %c0_8 = arith.constant 0 : index
    %c0_9 = arith.constant 0 : index
    %21 = vector.load %arg3[%c0_8, %c0_9] : memref<1x96xf32, #tpu.memory_space<vmem>>, vector<1x96xf32>
    %22 = vector.broadcast %21 : vector<1x96xf32> to vector<8x96xf32>
    %23 = arith.addf %20, %22 : vector<8x96xf32>
    %cst_10 = arith.constant 0.000000e+00 : f32
    %24 = vector.broadcast %cst_10 : f32 to vector<8x32xf32>
    %25 = vector.extract_strided_slice %23 {offsets = [0, 0], sizes = [8, 8], strides = [1, 1]} : vector<8x96xf32> to vector<8x8xf32>
    %26 = vector.extract_strided_slice %23 {offsets = [0, 32], sizes = [8, 8], strides = [1, 1]} : vector<8x96xf32> to vector<8x8xf32>
    %27 = vector.extract_strided_slice %23 {offsets = [0, 64], sizes = [8, 8], strides = [1, 1]} : vector<8x96xf32> to vector<8x8xf32>
    %cst_11 = arith.constant dense<0.000000e+00> : vector<8x8xf32>
    %28 = tpu.matmul %25, %26, %cst_11 {dimension_numbers = #tpu.dot_dimension_numbers<[1], [1], [0], [0], [0, 0, 1, 0], [], []>} : vector<8x8xf32>, vector<8x8xf32>, vector<8x8xf32> -> vector<8x8xf32>
    %cst_12 = arith.constant 0.353553385 : f32
    %29 = vector.broadcast %cst_12 : f32 to vector<8x8xf32>
    %30 = arith.mulf %28, %29 : vector<8x8xf32>
    %cst_13 = arith.constant dense<0xFF800000> : vector<8xf32>
    %31 = vector.multi_reduction <maximumf>, %30, %cst_13 [1] : vector<8x8xf32> to vector<8xf32>
    %32 = vector.shape_cast %31 : vector<8xf32> to vector<8x1xf32>
    %33 = vector.broadcast %32 : vector<8x1xf32> to vector<8x8xf32>
    %34 = arith.subf %30, %33 : vector<8x8xf32>
    %35 = math.exp %34 : vector<8x8xf32>
    %cst_14 = arith.constant dense<0.000000e+00> : vector<8xf32>
    %36 = vector.multi_reduction <add>, %35, %cst_14 [1] : vector<8x8xf32> to vector<8xf32>
    %37 = vector.shape_cast %36 : vector<8xf32> to vector<8x1xf32>
    %38 = tpu.reciprocal %37 {approx = true} : vector<8x1xf32> -> vector<8x1xf32>
    %39 = vector.broadcast %38 : vector<8x1xf32> to vector<8x8xf32>
    %40 = arith.mulf %35, %39 : vector<8x8xf32>
    %cst_15 = arith.constant dense<0.000000e+00> : vector<8x8xf32>
    %41 = tpu.matmul %40, %27, %cst_15 {dimension_numbers = #tpu.dot_dimension_numbers<[1], [0], [0], [1], [0, 0, 1, 1], [], []>} : vector<8x8xf32>, vector<8x8xf32>, vector<8x8xf32> -> vector<8x8xf32>
    %c0_16 = arith.constant 0 : index
    %c0_17 = arith.constant 0 : index
    %42 = vector.load %arg4[%c0_16, %c0_17] : memref<32x32xf32, #tpu.memory_space<vmem>>, vector<8x32xf32>
    %cst_18 = arith.constant dense<0.000000e+00> : vector<8x32xf32>
    %43 = tpu.matmul %41, %42, %cst_18 {dimension_numbers = #tpu.dot_dimension_numbers<[1], [0], [0], [1], [0, 0, 1, 1], [], []>} : vector<8x8xf32>, vector<8x32xf32>, vector<8x32xf32> -> vector<8x32xf32>
    %44 = arith.addf %24, %43 : vector<8x32xf32>
    %45 = vector.extract_strided_slice %23 {offsets = [0, 8], sizes = [8, 8], strides = [1, 1]} : vector<8x96xf32> to vector<8x8xf32>
    %46 = vector.extract_strided_slice %23 {offsets = [0, 40], sizes = [8, 8], strides = [1, 1]} : vector<8x96xf32> to vector<8x8xf32>
    %47 = vector.extract_strided_slice %23 {offsets = [0, 72], sizes = [8, 8], strides = [1, 1]} : vector<8x96xf32> to vector<8x8xf32>
    %cst_19 = arith.constant dense<0.000000e+00> : vector<8x8xf32>
    %48 = tpu.matmul %45, %46, %cst_19 {dimension_numbers = #tpu.dot_dimension_numbers<[1], [1], [0], [0], [0, 0, 1, 0], [], []>} : vector<8x8xf32>, vector<8x8xf32>, vector<8x8xf32> -> vector<8x8xf32>
    %cst_20 = arith.constant 0.353553385 : f32
    %49 = vector.broadcast %cst_20 : f32 to vector<8x8xf32>
    %50 = arith.mulf %48, %49 : vector<8x8xf32>
    %cst_21 = arith.constant dense<0xFF800000> : vector<8xf32>
    %51 = vector.multi_reduction <maximumf>, %50, %cst_21 [1] : vector<8x8xf32> to vector<8xf32>
    %52 = vector.shape_cast %51 : vector<8xf32> to vector<8x1xf32>
    %53 = vector.broadcast %52 : vector<8x1xf32> to vector<8x8xf32>
    %54 = arith.subf %50, %53 : vector<8x8xf32>
    %55 = math.exp %54 : vector<8x8xf32>
    %cst_22 = arith.constant dense<0.000000e+00> : vector<8xf32>
    %56 = vector.multi_reduction <add>, %55, %cst_22 [1] : vector<8x8xf32> to vector<8xf32>
    %57 = vector.shape_cast %56 : vector<8xf32> to vector<8x1xf32>
    %58 = tpu.reciprocal %57 {approx = true} : vector<8x1xf32> -> vector<8x1xf32>
    %59 = vector.broadcast %58 : vector<8x1xf32> to vector<8x8xf32>
    %60 = arith.mulf %55, %59 : vector<8x8xf32>
    %cst_23 = arith.constant dense<0.000000e+00> : vector<8x8xf32>
    %61 = tpu.matmul %60, %47, %cst_23 {dimension_numbers = #tpu.dot_dimension_numbers<[1], [0], [0], [1], [0, 0, 1, 1], [], []>} : vector<8x8xf32>, vector<8x8xf32>, vector<8x8xf32> -> vector<8x8xf32>
    %c8 = arith.constant 8 : index
    %c0_24 = arith.constant 0 : index
    %62 = vector.load %arg4[%c8, %c0_24] : memref<32x32xf32, #tpu.memory_space<vmem>>, vector<8x32xf32>
    %cst_25 = arith.constant dense<0.000000e+00> : vector<8x32xf32>
    %63 = tpu.matmul %61, %62, %cst_25 {dimension_numbers = #tpu.dot_dimension_numbers<[1], [0], [0], [1], [0, 0, 1, 1], [], []>} : vector<8x8xf32>, vector<8x32xf32>, vector<8x32xf32> -> vector<8x32xf32>
    %64 = arith.addf %44, %63 : vector<8x32xf32>
    %65 = vector.extract_strided_slice %23 {offsets = [0, 16], sizes = [8, 8], strides = [1, 1]} : vector<8x96xf32> to vector<8x8xf32>
    %66 = vector.extract_strided_slice %23 {offsets = [0, 48], sizes = [8, 8], strides = [1, 1]} : vector<8x96xf32> to vector<8x8xf32>
    %67 = vector.extract_strided_slice %23 {offsets = [0, 80], sizes = [8, 8], strides = [1, 1]} : vector<8x96xf32> to vector<8x8xf32>
    %cst_26 = arith.constant dense<0.000000e+00> : vector<8x8xf32>
    %68 = tpu.matmul %65, %66, %cst_26 {dimension_numbers = #tpu.dot_dimension_numbers<[1], [1], [0], [0], [0, 0, 1, 0], [], []>} : vector<8x8xf32>, vector<8x8xf32>, vector<8x8xf32> -> vector<8x8xf32>
    %cst_27 = arith.constant 0.353553385 : f32
    %69 = vector.broadcast %cst_27 : f32 to vector<8x8xf32>
    %70 = arith.mulf %68, %69 : vector<8x8xf32>
    %cst_28 = arith.constant dense<0xFF800000> : vector<8xf32>
    %71 = vector.multi_reduction <maximumf>, %70, %cst_28 [1] : vector<8x8xf32> to vector<8xf32>
    %72 = vector.shape_cast %71 : vector<8xf32> to vector<8x1xf32>
    %73 = vector.broadcast %72 : vector<8x1xf32> to vector<8x8xf32>
    %74 = arith.subf %70, %73 : vector<8x8xf32>
    %75 = math.exp %74 : vector<8x8xf32>
    %cst_29 = arith.constant dense<0.000000e+00> : vector<8xf32>
    %76 = vector.multi_reduction <add>, %75, %cst_29 [1] : vector<8x8xf32> to vector<8xf32>
    %77 = vector.shape_cast %76 : vector<8xf32> to vector<8x1xf32>
    %78 = tpu.reciprocal %77 {approx = true} : vector<8x1xf32> -> vector<8x1xf32>
    %79 = vector.broadcast %78 : vector<8x1xf32> to vector<8x8xf32>
    %80 = arith.mulf %75, %79 : vector<8x8xf32>
    %cst_30 = arith.constant dense<0.000000e+00> : vector<8x8xf32>
    %81 = tpu.matmul %80, %67, %cst_30 {dimension_numbers = #tpu.dot_dimension_numbers<[1], [0], [0], [1], [0, 0, 1, 1], [], []>} : vector<8x8xf32>, vector<8x8xf32>, vector<8x8xf32> -> vector<8x8xf32>
    %c16 = arith.constant 16 : index
    %c0_31 = arith.constant 0 : index
    %82 = vector.load %arg4[%c16, %c0_31] : memref<32x32xf32, #tpu.memory_space<vmem>>, vector<8x32xf32>
    %cst_32 = arith.constant dense<0.000000e+00> : vector<8x32xf32>
    %83 = tpu.matmul %81, %82, %cst_32 {dimension_numbers = #tpu.dot_dimension_numbers<[1], [0], [0], [1], [0, 0, 1, 1], [], []>} : vector<8x8xf32>, vector<8x32xf32>, vector<8x32xf32> -> vector<8x32xf32>
    %84 = arith.addf %64, %83 : vector<8x32xf32>
    %85 = vector.extract_strided_slice %23 {offsets = [0, 24], sizes = [8, 8], strides = [1, 1]} : vector<8x96xf32> to vector<8x8xf32>
    %86 = vector.extract_strided_slice %23 {offsets = [0, 56], sizes = [8, 8], strides = [1, 1]} : vector<8x96xf32> to vector<8x8xf32>
    %87 = vector.extract_strided_slice %23 {offsets = [0, 88], sizes = [8, 8], strides = [1, 1]} : vector<8x96xf32> to vector<8x8xf32>
    %cst_33 = arith.constant dense<0.000000e+00> : vector<8x8xf32>
    %88 = tpu.matmul %85, %86, %cst_33 {dimension_numbers = #tpu.dot_dimension_numbers<[1], [1], [0], [0], [0, 0, 1, 0], [], []>} : vector<8x8xf32>, vector<8x8xf32>, vector<8x8xf32> -> vector<8x8xf32>
    %cst_34 = arith.constant 0.353553385 : f32
    %89 = vector.broadcast %cst_34 : f32 to vector<8x8xf32>
    %90 = arith.mulf %88, %89 : vector<8x8xf32>
    %cst_35 = arith.constant dense<0xFF800000> : vector<8xf32>
    %91 = vector.multi_reduction <maximumf>, %90, %cst_35 [1] : vector<8x8xf32> to vector<8xf32>
    %92 = vector.shape_cast %91 : vector<8xf32> to vector<8x1xf32>
    %93 = vector.broadcast %92 : vector<8x1xf32> to vector<8x8xf32>
    %94 = arith.subf %90, %93 : vector<8x8xf32>
    %95 = math.exp %94 : vector<8x8xf32>
    %cst_36 = arith.constant dense<0.000000e+00> : vector<8xf32>
    %96 = vector.multi_reduction <add>, %95, %cst_36 [1] : vector<8x8xf32> to vector<8xf32>
    %97 = vector.shape_cast %96 : vector<8xf32> to vector<8x1xf32>
    %98 = tpu.reciprocal %97 {approx = true} : vector<8x1xf32> -> vector<8x1xf32>
    %99 = vector.broadcast %98 : vector<8x1xf32> to vector<8x8xf32>
    %100 = arith.mulf %95, %99 : vector<8x8xf32>
    %cst_37 = arith.constant dense<0.000000e+00> : vector<8x8xf32>
    %101 = tpu.matmul %100, %87, %cst_37 {dimension_numbers = #tpu.dot_dimension_numbers<[1], [0], [0], [1], [0, 0, 1, 1], [], []>} : vector<8x8xf32>, vector<8x8xf32>, vector<8x8xf32> -> vector<8x8xf32>
    %c24 = arith.constant 24 : index
    %c0_38 = arith.constant 0 : index
    %102 = vector.load %arg4[%c24, %c0_38] : memref<32x32xf32, #tpu.memory_space<vmem>>, vector<8x32xf32>
    %cst_39 = arith.constant dense<0.000000e+00> : vector<8x32xf32>
    %103 = tpu.matmul %101, %102, %cst_39 {dimension_numbers = #tpu.dot_dimension_numbers<[1], [0], [0], [1], [0, 0, 1, 1], [], []>} : vector<8x8xf32>, vector<8x32xf32>, vector<8x32xf32> -> vector<8x32xf32>
    %104 = arith.addf %84, %103 : vector<8x32xf32>
    %105 = arith.addf %0, %104 : vector<8x32xf32>
    %c0_40 = arith.constant 0 : index
    %c0_41 = arith.constant 0 : index
    %106 = vector.load %arg5[%c0_40, %c0_41] : memref<1x32xf32, #tpu.memory_space<vmem>>, vector<1x32xf32>
    %107 = vector.broadcast %106 : vector<1x32xf32> to vector<8x32xf32>
    %108 = arith.addf %105, %107 : vector<8x32xf32>
    %cst_42 = arith.constant dense<0.000000e+00> : vector<8xf32>
    %109 = vector.multi_reduction <add>, %0, %cst_42 [1] : vector<8x32xf32> to vector<8xf32>
    %110 = vector.shape_cast %109 : vector<8xf32> to vector<8x1xf32>
    %cst_43 = arith.constant 3.200000e+01 : f32
    %111 = vector.broadcast %cst_43 : f32 to vector<8x1xf32>
    %112 = arith.divf %110, %111 : vector<8x1xf32>
    %113 = arith.mulf %0, %0 : vector<8x32xf32>
    %cst_44 = arith.constant dense<0.000000e+00> : vector<8xf32>
    %114 = vector.multi_reduction <add>, %113, %cst_44 [1] : vector<8x32xf32> to vector<8xf32>
    %115 = vector.shape_cast %114 : vector<8xf32> to vector<8x1xf32>
    %cst_45 = arith.constant 3.200000e+01 : f32
    %116 = vector.broadcast %cst_45 : f32 to vector<8x1xf32>
    %117 = arith.divf %115, %116 : vector<8x1xf32>
    %118 = vector.broadcast %112 : vector<8x1xf32> to vector<8x32xf32>
    %119 = arith.subf %0, %118 : vector<8x32xf32>
    %120 = arith.mulf %112, %112 : vector<8x1xf32>
    %121 = arith.subf %117, %120 : vector<8x1xf32>
    %cst_46 = arith.constant 9.99999974E-6 : f32
    %122 = vector.broadcast %cst_46 : f32 to vector<8x1xf32>
    %123 = arith.addf %121, %122 : vector<8x1xf32>
    %124 = math.rsqrt %123 : vector<8x1xf32>
    %125 = vector.broadcast %124 : vector<8x1xf32> to vector<8x32xf32>
    %126 = arith.mulf %119, %125 : vector<8x32xf32>
    %c0_47 = arith.constant 0 : index
    %c0_48 = arith.constant 0 : index
    %127 = vector.load %arg6[%c0_47, %c0_48] : memref<32x64xf32, #tpu.memory_space<vmem>>, vector<32x64xf32>
    %cst_49 = arith.constant dense<0.000000e+00> : vector<8x64xf32>
    %128 = tpu.matmul %126, %127, %cst_49 {dimension_numbers = #tpu.dot_dimension_numbers<[1], [0], [0], [1], [0, 0, 1, 1], [], []>} : vector<8x32xf32>, vector<32x64xf32>, vector<8x64xf32> -> vector<8x64xf32>
    %c0_50 = arith.constant 0 : index
    %c0_51 = arith.constant 0 : index
    %129 = vector.load %arg7[%c0_50, %c0_51] : memref<1x64xf32, #tpu.memory_space<vmem>>, vector<1x64xf32>
    %130 = vector.broadcast %129 : vector<1x64xf32> to vector<8x64xf32>
    %131 = arith.addf %128, %130 : vector<8x64xf32>
    %cst_52 = arith.constant 5.000000e-01 : f32
    %132 = vector.broadcast %cst_52 : f32 to vector<8x64xf32>
    %133 = arith.mulf %132, %131 : vector<8x64xf32>
    %cst_53 = arith.constant 4.471500e-02 : f32
    %134 = vector.broadcast %cst_53 : f32 to vector<8x64xf32>
    %135 = arith.mulf %134, %131 : vector<8x64xf32>
    %136 = arith.mulf %135, %131 : vector<8x64xf32>
    %137 = arith.mulf %136, %131 : vector<8x64xf32>
    %138 = arith.addf %131, %137 : vector<8x64xf32>
    %cst_54 = arith.constant 0.797884583 : f32
    %139 = vector.broadcast %cst_54 : f32 to vector<8x64xf32>
    %140 = arith.mulf %139, %138 : vector<8x64xf32>
    %141 = math.tanh %140 : vector<8x64xf32>
    %cst_55 = arith.constant 1.000000e+00 : f32
    %142 = vector.broadcast %cst_55 : f32 to vector<8x64xf32>
    %143 = arith.addf %142, %141 : vector<8x64xf32>
    %144 = arith.mulf %133, %143 : vector<8x64xf32>
    %c0_56 = arith.constant 0 : index
    %c0_57 = arith.constant 0 : index
    %145 = vector.load %arg8[%c0_56, %c0_57] : memref<64x32xf32, #tpu.memory_space<vmem>>, vector<64x32xf32>
    %cst_58 = arith.constant dense<0.000000e+00> : vector<8x32xf32>
    %146 = tpu.matmul %144, %145, %cst_58 {dimension_numbers = #tpu.dot_dimension_numbers<[1], [0], [0], [1], [0, 0, 1, 1], [], []>} : vector<8x64xf32>, vector<64x32xf32>, vector<8x32xf32> -> vector<8x32xf32>
    %c0_59 = arith.constant 0 : index
    %c0_60 = arith.constant 0 : index
    %147 = vector.load %arg9[%c0_59, %c0_60] : memref<1x32xf32, #tpu.memory_space<vmem>>, vector<1x32xf32>
    %148 = vector.broadcast %147 : vector<1x32xf32> to vector<8x32xf32>
    %149 = arith.addf %146, %148 : vector<8x32xf32>
    %150 = arith.addf %108, %149 : vector<8x32xf32>
    %c0_61 = arith.constant 0 : index
    %c0_62 = arith.constant 0 : index
    %151 = vector.load %arg10[%c0_61, %c0_62] : memref<8x32xf32, #tpu.memory_space<vmem>>, vector<8x32xf32>
    tpu.vector_store %arg10[%c0_61, %c0_62], %150 {strides = array<i32>} : memref<8x32xf32, #tpu.memory_space<vmem>>, vector<8x32xf32>,
    return
  }
  func.func @transform_0(%arg0: i32) -> (i32, i32) {
    %c0_i32 = arith.constant 0 : i32
    %c0_i32_0 = arith.constant 0 : i32
    return %arg0, %c0_i32 : i32, i32
  }
  func.func @transform_1(%arg0: i32) -> (i32, i32) {
    %c0_i32 = arith.constant 0 : i32
    %c0_i32_0 = arith.constant 0 : i32
    %c0_i32_1 = arith.constant 0 : i32
    return %c0_i32, %c0_i32_0 : i32, i32
  }
  func.func @transform_2(%arg0: i32) -> (i32, i32) {
    %c0_i32 = arith.constant 0 : i32
    %c0_i32_0 = arith.constant 0 : i32
    %c0_i32_1 = arith.constant 0 : i32
    return %c0_i32, %c0_i32_0 : i32, i32
  }
  func.func @transform_3(%arg0: i32) -> (i32, i32) {
    %c0_i32 = arith.constant 0 : i32
    %c0_i32_0 = arith.constant 0 : i32
    %c0_i32_1 = arith.constant 0 : i32
    return %c0_i32, %c0_i32_0 : i32, i32
  }
  func.func @transform_4(%arg0: i32) -> (i32, i32) {
    %c0_i32 = arith.constant 0 : i32
    %c0_i32_0 = arith.constant 0 : i32
    %c0_i32_1 = arith.constant 0 : i32
    return %c0_i32, %c0_i32_0 : i32, i32
  }
  func.func @transform_5(%arg0: i32) -> (i32, i32) {
    %c0_i32 = arith.constant 0 : i32
    %c0_i32_0 = arith.constant 0 : i32
    %c0_i32_1 = arith.constant 0 : i32
    return %c0_i32, %c0_i32_0 : i32, i32
  }
  func.func @transform_6(%arg0: i32) -> (i32, i32) {
    %c0_i32 = arith.constant 0 : i32
    %c0_i32_0 = arith.constant 0 : i32
    %c0_i32_1 = arith.constant 0 : i32
    return %c0_i32, %c0_i32_0 : i32, i32
  }
  func.func @transform_7(%arg0: i32) -> (i32, i32) {
    %c0_i32 = arith.constant 0 : i32
    %c0_i32_0 = arith.constant 0 : i32
    %c0_i32_1 = arith.constant 0 : i32
    return %c0_i32, %c0_i32_0 : i32, i32
  }
  func.func @transform_8(%arg0: i32) -> (i32, i32) {
    %c0_i32 = arith.constant 0 : i32
    %c0_i32_0 = arith.constant 0 : i32
    %c0_i32_1 = arith.constant 0 : i32
    return %c0_i32, %c0_i32_0 : i32, i32
  }
  func.func @transform_9(%arg0: i32) -> (i32, i32) {
    %c0_i32 = arith.constant 0 : i32
    %c0_i32_0 = arith.constant 0 : i32
    return %arg0, %c0_i32 : i32, i32
  }
}

</mosaic_0001>

<llo_original>
// kernel: tpu_custom_call.1
$region0: #{tpu_custom_call.1}
  #allocation0 [shape = 'u32[]', space=smem, size = 0x4, offset = 0x4, fixed_abs, tag = 'smem constant byte address 0x4 - core index']
  #allocation1 [shape = 'u32[144,128]{1,0:T(1,128)}', space=vmem, size = 0x12000, scoped, tag = 'internal scratch']
  %s0 = inlined_call_operand.hbm [shape: f32[16,32], index: 0, kind: input, shape index: {}]
  %s1 = inlined_call_operand.vmem [shape: f32[32,96], index: 1, kind: input, shape index: {}]
  %s2 = inlined_call_operand.vmem [shape: f32[1,96], index: 2, kind: input, shape index: {}]
  %s3 = inlined_call_operand.vmem [shape: f32[32,32], index: 3, kind: input, shape index: {}]
  %s4 = inlined_call_operand.vmem [shape: f32[1,32], index: 4, kind: input, shape index: {}]
  %s5 = inlined_call_operand.vmem [shape: f32[32,64], index: 5, kind: input, shape index: {}]
  %s6 = inlined_call_operand.vmem [shape: f32[1,64], index: 6, kind: input, shape index: {}]
  %s7 = inlined_call_operand.vmem [shape: f32[64,32], index: 7, kind: input, shape index: {}]
  %s8 = inlined_call_operand.vmem [shape: f32[1,32], index: 8, kind: input, shape index: {}]
  %s9 = inlined_call_operand.hbm [shape: f32[16,32], index: 9, kind: output, shape index: {}]
  %s10 = sld [smem:[#allocation0]]
  $region73: #{tpu_custom_call.1} parent=0
    _
  %s12 = ssub.s32 1, %s10
  %s13 = scalar_select 0, %s12, %s10
  $region1: #{tpu_custom_call.1} parent=0
    #allocation2 [shape = 'u8[8192]{0}', space=vmem, size = 0x2000, scoped, tag = 'input window, operand 0']
    #allocation3 [shape = 's32[2]{0}', space=sflag, size = 0x8, scoped, tag = 'scoped memory for tpu_custom_call.1']
    #allocation4 [shape = 's32[2]{0}', space=sflag, size = 0x8, scoped, tag = 'scoped memory for tpu_custom_call.1']
    #allocation5 [shape = 'u8[8192]{0}', space=vmem, size = 0x2000, scoped, tag = 'output window, operand 0']
    %14 = vsyncpa [#allocation3], 0
    %s15 = scalar_lea.sflag [#allocation3], 1
    %16 = vsyncpa %s15, 0
    %17 = vsyncpa [#allocation4], 0
    %s18 = scalar_lea.sflag [#allocation4], 1
    %19 = vsyncpa %s18, 0
    loop: start=0, step=1, limit=4
    $region2: #{tpu_custom_call.1} parent=1 // loop_pre_header
      _
    $region3: #{tpu_custom_call.1} parent=1 // loop_header
      %s21 = sphi 0, %s25
      %p22 = scmp.ge.s32.totalorder %s21, 4
      %s31 = sphi 0, %s33
      %s34 = sphi 0, %s31
      %s35 = sphi 0, %s34
      %s51 = sphi 0, %s35
      %s55 = sphi 0, %s55
      %s57 = sphi 0, %s55
      %s58 = sphi 0, %s57
      %s72 = sphi 0, %s58
      %s76 = sphi 0, %s76
      %s78 = sphi 0, %s76
      %s79 = sphi 0, %s78
      %s93 = sphi 0, %s79
      %s97 = sphi 0, %s97
      %s99 = sphi 0, %s97
      %s100 = sphi 0, %s99
      %s114 = sphi 0, %s100
      %s118 = sphi 0, %s118
      %s120 = sphi 0, %s118
      %s121 = sphi 0, %s120
      %s135 = sphi 0, %s121
      %s139 = sphi 0, %s139
      %s141 = sphi 0, %s139
      %s142 = sphi 0, %s141
      %s156 = sphi 0, %s142
      %s160 = sphi 0, %s160
      %s162 = sphi 0, %s160
      %s163 = sphi 0, %s162
      %s177 = sphi 0, %s163
      %s181 = sphi 0, %s181
      %s183 = sphi 0, %s181
      %s184 = sphi 0, %s183
      %s198 = sphi 0, %s184
      %s202 = sphi 0, %s202
      %s204 = sphi 0, %s202
      %s205 = sphi 0, %s204
      %s219 = sphi 0, %s205
      %s225 = sphi 0, %s227
      %s228 = sphi 0, %s225
      %s229 = sphi 0, %s228
      %s245 = sphi 0, %s229
    $region4: #{tpu_custom_call.1} parent=1 // loop_header_branch
      %24 = sbr.rel (%p22) target = $region8
    $region5: #{tpu_custom_call.1} parent=1 // loop_body
      %s26 = ssub.s32 %s21, 1
      %s27 = ssub.s32 %s21, 2
      %s28 = sadd.s32 %s21, 1
      %s29 = ssub.s32 %s21, %s28
      %p30 = scmp.eq.s32.totalorder %s29, 0
      %s32 = sadd.s32 %s31, 1
      %s33 = scalar_select %p30, %s31, %s32
      %p36 = pneg %p30
      %p37 = scmp.eq.s32.totalorder %s21, 1
      %p38 = por %p36, %p37
      %p39 = scmp.ne.s32.totalorder %s31, %s34
      %p40 = scmp.eq.s32.totalorder %s21, 0
      %p41 = por %p39, %p40
      %p42 = scmp.ne.s32.totalorder %s31, %s34
      %p43 = scmp.eq.s32.totalorder %s26, 1
      %p44 = por %p42, %p43
      %p45 = scmp.ne.s32.totalorder %s34, %s35
      %p46 = scmp.eq.s32.totalorder %s26, 0
      %p47 = por %p45, %p46
      %p48 = scmp.ne.s32.totalorder %s34, %s35
      %p49 = scmp.eq.s32.totalorder %s27, 1
      %p50 = por %p48, %p49
      %p52 = scmp.ne.s32.totalorder %s35, %s51
      %p53 = scmp.eq.s32.totalorder %s27, 0
      %p54 = por %p52, %p53
      %s56 = sadd.s32 %s55, 1
      %p59 = scmp.eq.s32.totalorder %s21, 1
      %p60 = scmp.ne.s32.totalorder %s55, %s57
      %p61 = scmp.eq.s32.totalorder %s21, 0
      %p62 = por %p60, %p61
      %p63 = scmp.ne.s32.totalorder %s55, %s57
      %p64 = scmp.eq.s32.totalorder %s26, 1
      %p65 = por %p63, %p64
      %p66 = scmp.ne.s32.totalorder %s57, %s58
      %p67 = scmp.eq.s32.totalorder %s26, 0
      %p68 = por %p66, %p67
      %p69 = scmp.ne.s32.totalorder %s57, %s58
      %p70 = scmp.eq.s32.totalorder %s27, 1
      %p71 = por %p69, %p70
      %p73 = scmp.ne.s32.totalorder %s58, %s72
      %p74 = scmp.eq.s32.totalorder %s27, 0
      %p75 = por %p73, %p74
      %s77 = sadd.s32 %s76, 1
      %p80 = scmp.eq.s32.totalorder %s21, 1
      %p81 = scmp.ne.s32.totalorder %s76, %s78
      %p82 = scmp.eq.s32.totalorder %s21, 0
      %p83 = por %p81, %p82
      %p84 = scmp.ne.s32.totalorder %s76, %s78
      %p85 = scmp.eq.s32.totalorder %s26, 1
      %p86 = por %p84, %p85
      %p87 = scmp.ne.s32.totalorder %s78, %s79
      %p88 = scmp.eq.s32.totalorder %s26, 0
      %p89 = por %p87, %p88
      %p90 = scmp.ne.s32.totalorder %s78, %s79
      %p91 = scmp.eq.s32.totalorder %s27, 1
      %p92 = por %p90, %p91
      %p94 = scmp.ne.s32.totalorder %s79, %s93
      %p95 = scmp.eq.s32.totalorder %s27, 0
      %p96 = por %p94, %p95
      %s98 = sadd.s32 %s97, 1
      %p101 = scmp.eq.s32.totalorder %s21, 1
      %p102 = scmp.ne.s32.totalorder %s97, %s99
      %p103 = scmp.eq.s32.totalorder %s21, 0
      %p104 = por %p102, %p103
      %p105 = scmp.ne.s32.totalorder %s97, %s99
      %p106 = scmp.eq.s32.totalorder %s26, 1
      %p107 = por %p105, %p106
      %p108 = scmp.ne.s32.totalorder %s99, %s100
      %p109 = scmp.eq.s32.totalorder %s26, 0
      %p110 = por %p108, %p109
      %p111 = scmp.ne.s32.totalorder %s99, %s100
      %p112 = scmp.eq.s32.totalorder %s27, 1
      %p113 = por %p111, %p112
      %p115 = scmp.ne.s32.totalorder %s100, %s114
      %p116 = scmp.eq.s32.totalorder %s27, 0
      %p117 = por %p115, %p116
      %s119 = sadd.s32 %s118, 1
      %p122 = scmp.eq.s32.totalorder %s21, 1
      %p123 = scmp.ne.s32.totalorder %s118, %s120
      %p124 = scmp.eq.s32.totalorder %s21, 0
      %p125 = por %p123, %p124
      %p126 = scmp.ne.s32.totalorder %s118, %s120
      %p127 = scmp.eq.s32.totalorder %s26, 1
      %p128 = por %p126, %p127
      %p129 = scmp.ne.s32.totalorder %s120, %s121
      %p130 = scmp.eq.s32.totalorder %s26, 0
      %p131 = por %p129, %p130
      %p132 = scmp.ne.s32.totalorder %s120, %s121
      %p133 = scmp.eq.s32.totalorder %s27, 1
      %p134 = por %p132, %p133
      %p136 = scmp.ne.s32.totalorder %s121, %s135
      %p137 = scmp.eq.s32.totalorder %s27, 0
      %p138 = por %p136, %p137
      %s140 = sadd.s32 %s139, 1
      %p143 = scmp.eq.s32.totalorder %s21, 1
      %p144 = scmp.ne.s32.totalorder %s139, %s141
      %p145 = scmp.eq.s32.totalorder %s21, 0
      %p146 = por %p144, %p145
      %p147 = scmp.ne.s32.totalorder %s139, %s141
      %p148 = scmp.eq.s32.totalorder %s26, 1
      %p149 = por %p147, %p148
      %p150 = scmp.ne.s32.totalorder %s141, %s142
      %p151 = scmp.eq.s32.totalorder %s26, 0
      %p152 = por %p150, %p151
      %p153 = scmp.ne.s32.totalorder %s141, %s142
      %p154 = scmp.eq.s32.totalorder %s27, 1
      %p155 = por %p153, %p154
      %p157 = scmp.ne.s32.totalorder %s142, %s156
      %p158 = scmp.eq.s32.totalorder %s27, 0
      %p159 = por %p157, %p158
      %s161 = sadd.s32 %s160, 1
      %p164 = scmp.eq.s32.totalorder %s21, 1
      %p165 = scmp.ne.s32.totalorder %s160, %s162
      %p166 = scmp.eq.s32.totalorder %s21, 0
      %p167 = por %p165, %p166
      %p168 = scmp.ne.s32.totalorder %s160, %s162
      %p169 = scmp.eq.s32.totalorder %s26, 1
      %p170 = por %p168, %p169
      %p171 = scmp.ne.s32.totalorder %s162, %s163
      %p172 = scmp.eq.s32.totalorder %s26, 0
      %p173 = por %p171, %p172
      %p174 = scmp.ne.s32.totalorder %s162, %s163
      %p175 = scmp.eq.s32.totalorder %s27, 1
      %p176 = por %p174, %p175
      %p178 = scmp.ne.s32.totalorder %s163, %s177
      %p179 = scmp.eq.s32.totalorder %s27, 0
      %p180 = por %p178, %p179
      %s182 = sadd.s32 %s181, 1
      %p185 = scmp.eq.s32.totalorder %s21, 1
      %p186 = scmp.ne.s32.totalorder %s181, %s183
      %p187 = scmp.eq.s32.totalorder %s21, 0
      %p188 = por %p186, %p187
      %p189 = scmp.ne.s32.totalorder %s181, %s183
      %p190 = scmp.eq.s32.totalorder %s26, 1
      %p191 = por %p189, %p190
      %p192 = scmp.ne.s32.totalorder %s183, %s184
      %p193 = scmp.eq.s32.totalorder %s26, 0
      %p194 = por %p192, %p193
      %p195 = scmp.ne.s32.totalorder %s183, %s184
      %p196 = scmp.eq.s32.totalorder %s27, 1
      %p197 = por %p195, %p196
      %p199 = scmp.ne.s32.totalorder %s184, %s198
      %p200 = scmp.eq.s32.totalorder %s27, 0
      %p201 = por %p199, %p200
      %s203 = sadd.s32 %s202, 1
      %p206 = scmp.eq.s32.totalorder %s21, 1
      %p207 = scmp.ne.s32.totalorder %s202, %s204
      %p208 = scmp.eq.s32.totalorder %s21, 0
      %p209 = por %p207, %p208
      %p210 = scmp.ne.s32.totalorder %s202, %s204
      %p211 = scmp.eq.s32.totalorder %s26, 1
      %p212 = por %p210, %p211
      %p213 = scmp.ne.s32.totalorder %s204, %s205
      %p214 = scmp.eq.s32.totalorder %s26, 0
      %p215 = por %p213, %p214
      %p216 = scmp.ne.s32.totalorder %s204, %s205
      %p217 = scmp.eq.s32.totalorder %s27, 1
      %p218 = por %p216, %p217
      %p220 = scmp.ne.s32.totalorder %s205, %s219
      %p221 = scmp.eq.s32.totalorder %s27, 0
      %p222 = por %p220, %p221
      %s223 = ssub.s32 %s21, %s28
      %p224 = scmp.eq.s32.totalorder %s223, 0
      %s226 = sadd.s32 %s225, 1
      %s227 = scalar_select %p224, %s225, %s226
      %p230 = pneg %p224
      %p231 = scmp.eq.s32.totalorder %s21, 1
      %p232 = por %p230, %p231
      %p233 = scmp.ne.s32.totalorder %s225, %s228
      %p234 = scmp.eq.s32.totalorder %s21, 0
      %p235 = por %p233, %p234
      %p236 = scmp.ne.s32.totalorder %s225, %s228
      %p237 = scmp.eq.s32.totalorder %s26, 1
      %p238 = por %p236, %p237
      %p239 = scmp.ne.s32.totalorder %s228, %s229
      %p240 = scmp.eq.s32.totalorder %s26, 0
      %p241 = por %p239, %p240
      %p242 = scmp.ne.s32.totalorder %s228, %s229
      %p243 = scmp.eq.s32.totalorder %s27, 1
      %p244 = por %p242, %p243
      %p246 = scmp.ne.s32.totalorder %s229, %s245
      %p247 = scmp.eq.s32.totalorder %s27, 0
      %p248 = por %p246, %p247
      %p249 = scmp.le.s32.totalorder 1, %s21
      %p250 = scmp.lt.s32.totalorder %s21, 3
      %p251 = pnand %p249, %p250
      %p252 = pneg %p251
      // Predicated region
      $region9: #{tpu_custom_call.1} parent=5 // pred_check
        _
      $region10: #{tpu_custom_call.1} parent=5 // pred_check_branch
        %254 = sbr.rel (%p251) target = $region12
      $region11: #{tpu_custom_call.1} parent=5 // pred_region
        %s255 = ssub.s32 %s21, 1
        // Predicated region
        $region13: #{tpu_custom_call.1} parent=11 // pred_check
          %p256 = pneg %p68
        $region14: #{tpu_custom_call.1} parent=11 // pred_check_branch
          %258 = sbr.rel (%p256) target = $region16
        $region15: #{tpu_custom_call.1} parent=11 // pred_region
          _
        $region16: #{tpu_custom_call.1} parent=11 // pred_fallthru
          _
        // Predicated region
        $region17: #{tpu_custom_call.1} parent=11 // pred_check
          %p259 = pneg %p89
        $region18: #{tpu_custom_call.1} parent=11 // pred_check_branch
          %261 = sbr.rel (%p259) target = $region20
        $region19: #{tpu_custom_call.1} parent=11 // pred_region
          _
        $region20: #{tpu_custom_call.1} parent=11 // pred_fallthru
          _
        // Predicated region
        $region21: #{tpu_custom_call.1} parent=11 // pred_check
          %p262 = pneg %p110
        $region22: #{tpu_custom_call.1} parent=11 // pred_check_branch
          %264 = sbr.rel (%p262) target = $region24
        $region23: #{tpu_custom_call.1} parent=11 // pred_region
          _
        $region24: #{tpu_custom_call.1} parent=11 // pred_fallthru
          _
        // Predicated region
        $region25: #{tpu_custom_call.1} parent=11 // pred_check
          %p265 = pneg %p131
        $region26: #{tpu_custom_call.1} parent=11 // pred_check_branch
          %267 = sbr.rel (%p265) target = $region28
        $region27: #{tpu_custom_call.1} parent=11 // pred_region
          _
        $region28: #{tpu_custom_call.1} parent=11 // pred_fallthru
          _
        // Predicated region
        $region29: #{tpu_custom_call.1} parent=11 // pred_check
          %p268 = pneg %p152
        $region30: #{tpu_custom_call.1} parent=11 // pred_check_branch
          %270 = sbr.rel (%p268) target = $region32
        $region31: #{tpu_custom_call.1} parent=11 // pred_region
          _
        $region32: #{tpu_custom_call.1} parent=11 // pred_fallthru
          _
        // Predicated region
        $region33: #{tpu_custom_call.1} parent=11 // pred_check
          %p271 = pneg %p173
        $region34: #{tpu_custom_call.1} parent=11 // pred_check_branch
          %273 = sbr.rel (%p271) target = $region36
        $region35: #{tpu_custom_call.1} parent=11 // pred_region
          _
        $region36: #{tpu_custom_call.1} parent=11 // pred_fallthru
          _
        // Predicated region
        $region37: #{tpu_custom_call.1} parent=11 // pred_check
          %p274 = pneg %p194
        $region38: #{tpu_custom_call.1} parent=11 // pred_check_branch
          %276 = sbr.rel (%p274) target = $region40
        $region39: #{tpu_custom_call.1} parent=11 // pred_region
          _
        $region40: #{tpu_custom_call.1} parent=11 // pred_fallthru
          _
        // Predicated region
        $region41: #{tpu_custom_call.1} parent=11 // pred_check
          %p277 = pneg %p215
        $region42: #{tpu_custom_call.1} parent=11 // pred_check_branch
          %279 = sbr.rel (%p277) target = $region44
        $region43: #{tpu_custom_call.1} parent=11 // pred_region
          _
        $region44: #{tpu_custom_call.1} parent=11 // pred_fallthru
          _
      $region12: #{tpu_custom_call.1} parent=5 // pred_fallthru
        _
      %p280 = scmp.lt.s32.totalorder %s21, 2
      // Predicated region
      $region45: #{tpu_custom_call.1} parent=5 // pred_check
        %p281 = pneg %p280
      $region46: #{tpu_custom_call.1} parent=5 // pred_check_branch
        %283 = sbr.rel (%p281) target = $region48
      $region47: #{tpu_custom_call.1} parent=5 // pred_region
        // Predicated region
        $region49: #{tpu_custom_call.1} parent=47 // pred_check
          %p284 = pneg %p41
        $region50: #{tpu_custom_call.1} parent=47 // pred_check_branch
          %286 = sbr.rel (%p284) target = $region52
        $region51: #{tpu_custom_call.1} parent=47 // pred_region
          %s287 = sand.u32 %s31, 1
          %s288 = scalar_lea.sflag [#allocation3], %s287
          %s289 = sand.u32 %s31, 1
          %s290 = smul.addr %s289, 8
          %s291 = scalar_lea.vmem [#allocation2], %s290
          %s293 = ssub.s32 128, 128
          %294 = vsyncadd %s288, %s293
          %s295 = smul.addr %s21, 128
          %s296 = scalar_lea.hbm %s0, %s295
          %s298 = sshll.u32 %s291, 4
          %s299 = int_to_ptr.vmem [resolvable:$true] %s298
          %301 = dma.hbm_to_vmem [thread:$0]  %s296, 128, %s299, %s288
        $region52: #{tpu_custom_call.1} parent=47 // pred_fallthru
          _
      $region48: #{tpu_custom_call.1} parent=5 // pred_fallthru
        _
      %p302 = scmp.le.s32.totalorder 1, %s21
      %p303 = scmp.lt.s32.totalorder %s21, 3
      %p304 = pnand %p302, %p303
      %p305 = pneg %p304
      // Predicated region
      $region53: #{tpu_custom_call.1} parent=5 // pred_check
        _
      $region54: #{tpu_custom_call.1} parent=5 // pred_check_branch
        %307 = sbr.rel (%p304) target = $region56
      $region55: #{tpu_custom_call.1} parent=5 // pred_region
        %s308 = ssub.s32 %s21, 1
        %s309 = sand.u32 %s34, 1
        %s310 = scalar_lea.sflag [#allocation3], %s309
        %s311 = sand.u32 %s34, 1
        %s312 = smul.addr %s311, 8
        %s313 = scalar_lea.vmem [#allocation2], %s312
        // Predicated region
        $region57: #{tpu_custom_call.1} parent=55 // pred_check
          %p314 = pneg %p47
        $region58: #{tpu_custom_call.1} parent=55 // pred_check_branch
          %316 = sbr.rel (%p314) target = $region60
        $region59: #{tpu_custom_call.1} parent=55 // pred_region
          %317 = dma.done %s310, 128
        $region60: #{tpu_custom_call.1} parent=55 // pred_fallthru
          _
        %s318 = sand.u32 %s34, 1
        %s319 = scalar_lea.sflag [#allocation3], %s318
        %s320 = sand.u32 %s34, 1
        %s321 = smul.addr %s320, 8
        %s322 = scalar_lea.vmem [#allocation2], %s321
        %p323 = pneg %p47
        %p324 = pneg %p44
        %p325 = pneg %p68
        %p326 = pneg %p65
        %p327 = pneg %p89
        %p328 = pneg %p86
        %p329 = pneg %p110
        %p330 = pneg %p107
        %p331 = pneg %p131
        %p332 = pneg %p128
        %p333 = pneg %p152
        %p334 = pneg %p149
        %p335 = pneg %p173
        %p336 = pneg %p170
        %p337 = pneg %p194
        %p338 = pneg %p191
        %p339 = pneg %p215
        %p340 = pneg %p212
        %p341 = pneg %p241
        %p342 = pneg %p238
        %s343 = sand.u32 %s228, 1
        %s344 = scalar_lea.sflag [#allocation4], %s343
        %s345 = sand.u32 %s228, 1
        %s346 = smul.addr %s345, 8
        %s347 = scalar_lea.vmem [#allocation5], %s346
        %v348 = vld [vmem:[%s313] sm:$0xff]
        %vm349 = vcmask 261120
        %v350 = vsel %vm349, %v348, 0.0
        %351 = vadd.xlane.f32.xlu0 %v350
        %v352 = vpop.xlane.xlu0 %351
        %v353 = vrcp.pop 32.0
        %v354 = vmul.f32 %v352, %v353
        %v355 = vmul.f32 %v348, %v348
        %v356 = vsel %vm349, %v355, 0.0
        %357 = vadd.xlane.f32.xlu0 %v356
        %v358 = vpop.xlane.xlu0 %357
        %v359 = vmul.f32 %v358, %v353
        %v360 = vsub.f32 %v348, %v354
        %v361 = vmul.f32 %v354, %v354
        %v362 = vsub.f32 %v359, %v361
        %v363 = vadd.f32 %v362, 1e-05
        %v364 = vrsqrt.pop %v363
        %v365 = vmul.f32 %v360, %v364
        %v366 = vld [vmem:[%s1] sm:$0xff]
        %v367 = vld [vmem:[%s1 + $0x8] sm:$0xff]
        %v368 = vld [vmem:[%s1 + $0x10] sm:$0xff]
        %v369 = vld [vmem:[%s1 + $0x18] sm:$0xff]
        %v370 = vld [vmem:[%s2] sm:$0x1]
        %v372 = vlaneseq
        %v373 = vshrl.u32 %v372, 7
        %v374 = vsub.s32 0, %v373
        %v375 = vrot.slane %v370, %v374
        %v378 = vsel %vm349, %v365, 0
        %380 = vmatprep.subr.mxu0 0.0
        %381 = vmatpush1.msra.mxu0 %v366
        %382 = vmatprep.subr.mxu0 0.0
        %383 = vmatpush1.msra.mxu0 %v367
        %384 = vmatprep.subr.mxu0 0.0
        %385 = vmatpush1.msra.mxu0 %v368
        %386 = vmatprep.subr.mxu0 0.0
        %387 = vmatpush1.msra.mxu0 %v369
        %388 = vmatprep.subr.mxu0 0.0
        %389 = vmatpush1.msra.mxu0 0.0
        %390 = vmatprep.subr.mxu0 0.0
        %391 = vmatpush1.msra.mxu0 0.0
        %392 = vmatprep.subr.mxu0 0.0
        %393 = vmatpush1.msra.mxu0 0.0
        %394 = vmatprep.subr.mxu0 0.0
        %395 = vmatpush1.msra.mxu0 0.0
        %396 = vmatprep.subr.mxu0 0.0
        %397 = vmatpush1.msra.mxu0 0.0
        %398 = vmatprep.subr.mxu0 0.0
        %399 = vmatpush1.msra.mxu0 0.0
        %400 = vmatprep.subr.mxu0 0.0
        %401 = vmatpush1.msra.mxu0 0.0
        %402 = vmatprep.subr.mxu0 0.0
        %403 = vmatpush1.msra.mxu0 0.0
        %404 = vmatprep.subr.mxu0 0.0
        %405 = vmatpush1.msra.mxu0 0.0
        %406 = vmatprep.subr.mxu0 0.0
        %407 = vmatpush1.msra.mxu0 0.0
        %408 = vmatprep.subr.mxu0 0.0
        %409 = vmatpush1.msra.mxu0 0.0
        %410 = vmatprep.subr.mxu0 0.0
        %411 = vmatpush1.msra.mxu0 0.0
        %412 = vmatprep.subr.mxu0 0.0
        %413 = vmatpush1.msra.mxu0 0.0
        %414 = vmatprep.subr.mxu0 0.0
        %415 = vmatpush1.msra.mxu0 0.0
        %416 = vmatprep.subr.mxu0 0.0
        %417 = vmatpush1.msra.mxu0 0.0
        %418 = vmatprep.subr.mxu0 0.0
        %419 = vmatpush1.msra.mxu0 0.0
        %420 = vmatprep.subr.mxu0 0.0
        %421 = vmatpush1.msra.mxu0 0.0
        %422 = vmatprep.subr.mxu0 0.0
        %423 = vmatpush1.msra.mxu0 0.0
        %424 = vmatprep.subr.mxu0 0.0
        %425 = vmatpush1.msra.mxu0 0.0
        %426 = vmatprep.subr.mxu0 0.0
        %427 = vmatpush1.msra.mxu0 0.0
        %428 = vmatprep.subr.mxu0 0.0
        %429 = vmatpush1.msra.mxu0 0.0
        %430 = vmatprep.subr.mxu0 0.0
        %431 = vmatpush1.msra.mxu0 0.0
        %432 = vmatprep.subr.mxu0 0.0
        %433 = vmatpush1.msra.mxu0 0.0
        %434 = vmatprep.subr.mxu0 0.0
        %435 = vmatpush1.msra.mxu0 0.0
        %436 = vmatprep.subr.mxu0 0.0
        %437 = vmatpush1.msra.mxu0 0.0
        %438 = vmatprep.subr.mxu0 0.0
        %439 = vmatpush1.msra.mxu0 0.0
        %440 = vmatprep.subr.mxu0 0.0
        %441 = vmatpush1.msra.mxu0 0.0
        %442 = vmatprep.subr.mxu0 0.0
        %443 = vmatpush1.msra.mxu0 0.0
        %444 = vmatprep.mubr.f32.mxu0 0.0
        %445 = vmatmul.mubr.f32.gmra.mrb[0].mxu0 %v378
        %v446 = vpop.f32.mrb[0].mxu0
        %v447 = vadd.f32 %v375, %v446
        %v448 = vpop.f32.mrb[0].mxu0
        %449 = vdwg.mxu0
        %451 = vrot.lane.b32.xlu0 %v447, 96
        %v452 = vpop.permute.xlu0 %451
        %vm453 = vcmask 64512
        %v454 = vsel %vm453, %v447, 0
        %v456 = vsel %vm453, %v452, 0
        %458 = vmatprep.subr.mxu0 0.0
        %459 = vmatpush1.xpose.msra.mxu0 %v456
        %460 = vmatprep.subr.mxu0 0.0
        %461 = vmatpush1.xpose.msra.mxu0 0.0
        %462 = vmatprep.subr.mxu0 0.0
        %463 = vmatpush1.xpose.msra.mxu0 0.0
        %464 = vmatprep.subr.mxu0 0.0
        %465 = vmatpush1.xpose.msra.mxu0 0.0
        %466 = vmatprep.subr.mxu0 0.0
        %467 = vmatpush1.xpose.msra.mxu0 0.0
        %468 = vmatprep.subr.mxu0 0.0
        %469 = vmatpush1.xpose.msra.mxu0 0.0
        %470 = vmatprep.subr.mxu0 0.0
        %471 = vmatpush1.xpose.msra.mxu0 0.0
        %472 = vmatprep.subr.mxu0 0.0
        %473 = vmatpush1.xpose.msra.mxu0 0.0
        %474 = vmatprep.subr.mxu0 0.0
        %475 = vmatpush1.xpose.msra.mxu0 0.0
        %476 = vmatprep.subr.mxu0 0.0
        %477 = vmatpush1.xpose.msra.mxu0 0.0
        %478 = vmatprep.subr.mxu0 0.0
        %479 = vmatpush1.xpose.msra.mxu0 0.0
        %480 = vmatprep.subr.mxu0 0.0
        %481 = vmatpush1.xpose.msra.mxu0 0.0
        %482 = vmatprep.subr.mxu0 0.0
        %483 = vmatpush1.xpose.msra.mxu0 0.0
        %484 = vmatprep.subr.mxu0 0.0
        %485 = vmatpush1.xpose.msra.mxu0 0.0
        %486 = vmatprep.subr.mxu0 0.0
        %487 = vmatpush1.xpose.msra.mxu0 0.0
        %488 = vmatprep.subr.mxu0 0.0
        %489 = vmatpush1.xpose.msra.mxu0 0.0
        %490 = vmatprep.subr.mxu0 0.0
        %491 = vmatpush1.xpose.msra.mxu0 0.0
        %492 = vmatprep.subr.mxu0 0.0
        %493 = vmatpush1.xpose.msra.mxu0 0.0
        %494 = vmatprep.subr.mxu0 0.0
        %495 = vmatpush1.xpose.msra.mxu0 0.0
        %496 = vmatprep.subr.mxu0 0.0
        %497 = vmatpush1.xpose.msra.mxu0 0.0
        %498 = vmatprep.subr.mxu0 0.0
        %499 = vmatpush1.xpose.msra.mxu0 0.0
        %500 = vmatprep.subr.mxu0 0.0
        %501 = vmatpush1.xpose.msra.mxu0 0.0
        %502 = vmatprep.subr.mxu0 0.0
        %503 = vmatpush1.xpose.msra.mxu0 0.0
        %504 = vmatprep.subr.mxu0 0.0
        %505 = vmatpush1.xpose.msra.mxu0 0.0
        %506 = vmatprep.subr.mxu0 0.0
        %507 = vmatpush1.xpose.msra.mxu0 0.0
        %508 = vmatprep.subr.mxu0 0.0
        %509 = vmatpush1.xpose.msra.mxu0 0.0
        %510 = vmatprep.subr.mxu0 0.0
        %511 = vmatpush1.xpose.msra.mxu0 0.0
        %512 = vmatprep.subr.mxu0 0.0
        %513 = vmatpush1.xpose.msra.mxu0 0.0
        %514 = vmatprep.subr.mxu0 0.0
        %515 = vmatpush1.xpose.msra.mxu0 0.0
        %516 = vmatprep.subr.mxu0 0.0
        %517 = vmatpush1.xpose.msra.mxu0 0.0
        %518 = vmatprep.subr.mxu0 0.0
        %519 = vmatpush1.xpose.msra.mxu0 0.0
        %520 = vmatprep.subr.mxu0 0.0
        %521 = vmatpush1.xpose.msra.mxu0 0.0
        %522 = vmatprep.mubr.f32.mxu0 0.0
        %523 = vmatmul.mubr.f32.gmra.mrb[0].mxu0 %v454
        %v524 = vpop.f32.mrb[0].mxu0
        %v525 = vadd.f32 0.0, %v524
        %v526 = vpop.f32.mrb[0].mxu0
        %527 = vdwg.mxu0
        %v528 = vmul.f32 %v525, 0.35355338
        %v529 = vsel %vm453, %v528, -inf
        %530 = vmax.xlane.f32.xlu0 %v529
        %v531 = vpop.xlane.xlu0 %530
        %v532 = vsub.f32 %v528, %v531
        %v533 = vmul.f32 %v532, 1.442695
        %v534 = vpow.pop %v533
        %v535 = vsel %vm453, %v534, 0.0
        %536 = vadd.xlane.f32.xlu0 %v535
        %v537 = vpop.xlane.xlu0 %536
        %v538 = vrcp.pop %v537
        %v539 = vmul.f32 %v534, %v538
        %540 = vrot.lane.b32.xlu0 %v447, 64
        %v541 = vpop.permute.xlu0 %540
        %v544 = vsel %vm453, %v539, 0
        %546 = vmatprep.subr.mxu0 0.0
        %547 = vmatpush1.msra.mxu0 %v541
        %548 = vmatprep.subr.mxu0 0.0
        %549 = vmatpush1.msra.mxu0 0.0
        %550 = vmatprep.subr.mxu0 0.0
        %551 = vmatpush1.msra.mxu0 0.0
        %552 = vmatprep.subr.mxu0 0.0
        %553 = vmatpush1.msra.mxu0 0.0
        %554 = vmatprep.subr.mxu0 0.0
        %555 = vmatpush1.msra.mxu0 0.0
        %556 = vmatprep.subr.mxu0 0.0
        %557 = vmatpush1.msra.mxu0 0.0
        %558 = vmatprep.subr.mxu0 0.0
        %559 = vmatpush1.msra.mxu0 0.0
        %560 = vmatprep.subr.mxu0 0.0
        %561 = vmatpush1.msra.mxu0 0.0
        %562 = vmatprep.subr.mxu0 0.0
        %563 = vmatpush1.msra.mxu0 0.0
        %564 = vmatprep.subr.mxu0 0.0
        %565 = vmatpush1.msra.mxu0 0.0
        %566 = vmatprep.subr.mxu0 0.0
        %567 = vmatpush1.msra.mxu0 0.0
        %568 = vmatprep.subr.mxu0 0.0
        %569 = vmatpush1.msra.mxu0 0.0
        %570 = vmatprep.subr.mxu0 0.0
        %571 = vmatpush1.msra.mxu0 0.0
        %572 = vmatprep.subr.mxu0 0.0
        %573 = vmatpush1.msra.mxu0 0.0
        %574 = vmatprep.subr.mxu0 0.0
        %575 = vmatpush1.msra.mxu0 0.0
        %576 = vmatprep.subr.mxu0 0.0
        %577 = vmatpush1.msra.mxu0 0.0
        %578 = vmatprep.subr.mxu0 0.0
        %579 = vmatpush1.msra.mxu0 0.0
        %580 = vmatprep.subr.mxu0 0.0
        %581 = vmatpush1.msra.mxu0 0.0
        %582 = vmatprep.subr.mxu0 0.0
        %583 = vmatpush1.msra.mxu0 0.0
        %584 = vmatprep.subr.mxu0 0.0
        %585 = vmatpush1.msra.mxu0 0.0
        %586 = vmatprep.subr.mxu0 0.0
        %587 = vmatpush1.msra.mxu0 0.0
        %588 = vmatprep.subr.mxu0 0.0
        %589 = vmatpush1.msra.mxu0 0.0
        %590 = vmatprep.subr.mxu0 0.0
        %591 = vmatpush1.msra.mxu0 0.0
        %592 = vmatprep.subr.mxu0 0.0
        %593 = vmatpush1.msra.mxu0 0.0
        %594 = vmatprep.subr.mxu0 0.0
        %595 = vmatpush1.msra.mxu0 0.0
        %596 = vmatprep.subr.mxu0 0.0
        %597 = vmatpush1.msra.mxu0 0.0
        %598 = vmatprep.subr.mxu0 0.0
        %599 = vmatpush1.msra.mxu0 0.0
        %600 = vmatprep.subr.mxu0 0.0
        %601 = vmatpush1.msra.mxu0 0.0
        %602 = vmatprep.subr.mxu0 0.0
        %603 = vmatpush1.msra.mxu0 0.0
        %604 = vmatprep.subr.mxu0 0.0
        %605 = vmatpush1.msra.mxu0 0.0
        %606 = vmatprep.subr.mxu0 0.0
        %607 = vmatpush1.msra.mxu0 0.0
        %608 = vmatprep.subr.mxu0 0.0
        %609 = vmatpush1.msra.mxu0 0.0
        %610 = vmatprep.mubr.f32.mxu0 0.0
        %611 = vmatmul.mubr.f32.gmra.mrb[0].mxu0 %v544
        %v612 = vpop.f32.mrb[0].mxu0
        %v613 = vadd.f32 0.0, %v612
        %v614 = vpop.f32.mrb[0].mxu0
        %615 = vdwg.mxu0
        %v616 = vld [vmem:[%s3] sm:$0xff]
        %617 = vrot.lane.b32.xlu0 %v447, 120
        %v618 = vpop.permute.xlu0 %617
        %619 = vrot.lane.b32.xlu0 %v447, 88
        %v620 = vpop.permute.xlu0 %619
        %v621 = vsel %vm453, %v618, 0
        %v623 = vsel %vm453, %v620, 0
        %625 = vmatprep.subr.mxu0 0.0
        %626 = vmatpush1.xpose.msra.mxu0 %v623
        %627 = vmatprep.subr.mxu0 0.0
        %628 = vmatpush1.xpose.msra.mxu0 0.0
        %629 = vmatprep.subr.mxu0 0.0
        %630 = vmatpush1.xpose.msra.mxu0 0.0
        %631 = vmatprep.subr.mxu0 0.0
        %632 = vmatpush1.xpose.msra.mxu0 0.0
        %633 = vmatprep.subr.mxu0 0.0
        %634 = vmatpush1.xpose.msra.mxu0 0.0
        %635 = vmatprep.subr.mxu0 0.0
        %636 = vmatpush1.xpose.msra.mxu0 0.0
        %637 = vmatprep.subr.mxu0 0.0
        %638 = vmatpush1.xpose.msra.mxu0 0.0
        %639 = vmatprep.subr.mxu0 0.0
        %640 = vmatpush1.xpose.msra.mxu0 0.0
        %641 = vmatprep.subr.mxu0 0.0
        %642 = vmatpush1.xpose.msra.mxu0 0.0
        %643 = vmatprep.subr.mxu0 0.0
        %644 = vmatpush1.xpose.msra.mxu0 0.0
        %645 = vmatprep.subr.mxu0 0.0
        %646 = vmatpush1.xpose.msra.mxu0 0.0
        %647 = vmatprep.subr.mxu0 0.0
        %648 = vmatpush1.xpose.msra.mxu0 0.0
        %649 = vmatprep.subr.mxu0 0.0
        %650 = vmatpush1.xpose.msra.mxu0 0.0
        %651 = vmatprep.subr.mxu0 0.0
        %652 = vmatpush1.xpose.msra.mxu0 0.0
        %653 = vmatprep.subr.mxu0 0.0
        %654 = vmatpush1.xpose.msra.mxu0 0.0
        %655 = vmatprep.subr.mxu0 0.0
        %656 = vmatpush1.xpose.msra.mxu0 0.0
        %657 = vmatprep.subr.mxu0 0.0
        %658 = vmatpush1.xpose.msra.mxu0 0.0
        %659 = vmatprep.subr.mxu0 0.0
        %660 = vmatpush1.xpose.msra.mxu0 0.0
        %661 = vmatprep.subr.mxu0 0.0
        %662 = vmatpush1.xpose.msra.mxu0 0.0
        %663 = vmatprep.subr.mxu0 0.0
        %664 = vmatpush1.xpose.msra.mxu0 0.0
        %665 = vmatprep.subr.mxu0 0.0
        %666 = vmatpush1.xpose.msra.mxu0 0.0
        %667 = vmatprep.subr.mxu0 0.0
        %668 = vmatpush1.xpose.msra.mxu0 0.0
        %669 = vmatprep.subr.mxu0 0.0
        %670 = vmatpush1.xpose.msra.mxu0 0.0
        %671 = vmatprep.subr.mxu0 0.0
        %672 = vmatpush1.xpose.msra.mxu0 0.0
        %673 = vmatprep.subr.mxu0 0.0
        %674 = vmatpush1.xpose.msra.mxu0 0.0
        %675 = vmatprep.subr.mxu0 0.0
        %676 = vmatpush1.xpose.msra.mxu0 0.0
        %677 = vmatprep.subr.mxu0 0.0
        %678 = vmatpush1.xpose.msra.mxu0 0.0
        %679 = vmatprep.subr.mxu0 0.0
        %680 = vmatpush1.xpose.msra.mxu0 0.0
        %681 = vmatprep.subr.mxu0 0.0
        %682 = vmatpush1.xpose.msra.mxu0 0.0
        %683 = vmatprep.subr.mxu0 0.0
        %684 = vmatpush1.xpose.msra.mxu0 0.0
        %685 = vmatprep.subr.mxu0 0.0
        %686 = vmatpush1.xpose.msra.mxu0 0.0
        %687 = vmatprep.subr.mxu0 0.0
        %688 = vmatpush1.xpose.msra.mxu0 0.0
        %689 = vmatprep.mubr.f32.mxu0 0.0
        %690 = vmatmul.mubr.f32.gmra.mrb[0].mxu0 %v621
        %v691 = vpop.f32.mrb[0].mxu0
        %v692 = vadd.f32 0.0, %v691
        %v693 = vpop.f32.mrb[0].mxu0
        %694 = vdwg.mxu0
        %v695 = vmul.f32 %v692, 0.35355338
        %v696 = vsel %vm453, %v695, -inf
        %697 = vmax.xlane.f32.xlu0 %v696
        %v698 = vpop.xlane.xlu0 %697
        %v699 = vsub.f32 %v695, %v698
        %v700 = vmul.f32 %v699, 1.442695
        %v701 = vpow.pop %v700
        %v702 = vsel %vm453, %v701, 0.0
        %703 = vadd.xlane.f32.xlu0 %v702
        %v704 = vpop.xlane.xlu0 %703
        %v705 = vrcp.pop %v704
        %v706 = vmul.f32 %v701, %v705
        %707 = vrot.lane.b32.xlu0 %v447, 56
        %v708 = vpop.permute.xlu0 %707
        %v711 = vsel %vm453, %v706, 0
        %713 = vmatprep.subr.mxu0 0.0
        %714 = vmatpush1.msra.mxu0 %v708
        %715 = vmatprep.subr.mxu0 0.0
        %716 = vmatpush1.msra.mxu0 0.0
        %717 = vmatprep.subr.mxu0 0.0
        %718 = vmatpush1.msra.mxu0 0.0
        %719 = vmatprep.subr.mxu0 0.0
        %720 = vmatpush1.msra.mxu0 0.0
        %721 = vmatprep.subr.mxu0 0.0
        %722 = vmatpush1.msra.mxu0 0.0
        %723 = vmatprep.subr.mxu0 0.0
        %724 = vmatpush1.msra.mxu0 0.0
        %725 = vmatprep.subr.mxu0 0.0
        %726 = vmatpush1.msra.mxu0 0.0
        %727 = vmatprep.subr.mxu0 0.0
        %728 = vmatpush1.msra.mxu0 0.0
        %729 = vmatprep.subr.mxu0 0.0
        %730 = vmatpush1.msra.mxu0 0.0
        %731 = vmatprep.subr.mxu0 0.0
        %732 = vmatpush1.msra.mxu0 0.0
        %733 = vmatprep.subr.mxu0 0.0
        %734 = vmatpush1.msra.mxu0 0.0
        %735 = vmatprep.subr.mxu0 0.0
        %736 = vmatpush1.msra.mxu0 0.0
        %737 = vmatprep.subr.mxu0 0.0
        %738 = vmatpush1.msra.mxu0 0.0
        %739 = vmatprep.subr.mxu0 0.0
        %740 = vmatpush1.msra.mxu0 0.0
        %741 = vmatprep.subr.mxu0 0.0
        %742 = vmatpush1.msra.mxu0 0.0
        %743 = vmatprep.subr.mxu0 0.0
        %744 = vmatpush1.msra.mxu0 0.0
        %745 = vmatprep.subr.mxu0 0.0
        %746 = vmatpush1.msra.mxu0 0.0
        %747 = vmatprep.subr.mxu0 0.0
        %748 = vmatpush1.msra.mxu0 0.0
        %749 = vmatprep.subr.mxu0 0.0
        %750 = vmatpush1.msra.mxu0 0.0
        %751 = vmatprep.subr.mxu0 0.0
        %752 = vmatpush1.msra.mxu0 0.0
        %753 = vmatprep.subr.mxu0 0.0
        %754 = vmatpush1.msra.mxu0 0.0
        %755 = vmatprep.subr.mxu0 0.0
        %756 = vmatpush1.msra.mxu0 0.0
        %757 = vmatprep.subr.mxu0 0.0
        %758 = vmatpush1.msra.mxu0 0.0
        %759 = vmatprep.subr.mxu0 0.0
        %760 = vmatpush1.msra.mxu0 0.0
        %761 = vmatprep.subr.mxu0 0.0
        %762 = vmatpush1.msra.mxu0 0.0
        %763 = vmatprep.subr.mxu0 0.0
        %764 = vmatpush1.msra.mxu0 0.0
        %765 = vmatprep.subr.mxu0 0.0
        %766 = vmatpush1.msra.mxu0 0.0
        %767 = vmatprep.subr.mxu0 0.0
        %768 = vmatpush1.msra.mxu0 0.0
        %769 = vmatprep.subr.mxu0 0.0
        %770 = vmatpush1.msra.mxu0 0.0
        %771 = vmatprep.subr.mxu0 0.0
        %772 = vmatpush1.msra.mxu0 0.0
        %773 = vmatprep.subr.mxu0 0.0
        %774 = vmatpush1.msra.mxu0 0.0
        %775 = vmatprep.subr.mxu0 0.0
        %776 = vmatpush1.msra.mxu0 0.0
        %777 = vmatprep.mubr.f32.mxu0 0.0
        %778 = vmatmul.mubr.f32.gmra.mrb[0].mxu0 %v711
        %v779 = vpop.f32.mrb[0].mxu0
        %v780 = vadd.f32 0.0, %v779
        %v781 = vpop.f32.mrb[0].mxu0
        %782 = vdwg.mxu0
        %v783 = vld [vmem:[%s3 + $0x8] sm:$0xff]
        %v785 = vsel %vm453, %v780, 0
        %787 = vmatprep.subr.mxu0 0.0
        %788 = vmatpush1.msra.mxu0 %v783
        %789 = vmatprep.subr.mxu0 0.0
        %790 = vmatpush1.msra.mxu0 0.0
        %791 = vmatprep.subr.mxu0 0.0
        %792 = vmatpush1.msra.mxu0 0.0
        %793 = vmatprep.subr.mxu0 0.0
        %794 = vmatpush1.msra.mxu0 0.0
        %795 = vmatprep.subr.mxu0 0.0
        %796 = vmatpush1.msra.mxu0 0.0
        %797 = vmatprep.subr.mxu0 0.0
        %798 = vmatpush1.msra.mxu0 0.0
        %799 = vmatprep.subr.mxu0 0.0
        %800 = vmatpush1.msra.mxu0 0.0
        %801 = vmatprep.subr.mxu0 0.0
        %802 = vmatpush1.msra.mxu0 0.0
        %803 = vmatprep.subr.mxu0 0.0
        %804 = vmatpush1.msra.mxu0 0.0
        %805 = vmatprep.subr.mxu0 0.0
        %806 = vmatpush1.msra.mxu0 0.0
        %807 = vmatprep.subr.mxu0 0.0
        %808 = vmatpush1.msra.mxu0 0.0
        %809 = vmatprep.subr.mxu0 0.0
        %810 = vmatpush1.msra.mxu0 0.0
        %811 = vmatprep.subr.mxu0 0.0
        %812 = vmatpush1.msra.mxu0 0.0
        %813 = vmatprep.subr.mxu0 0.0
        %814 = vmatpush1.msra.mxu0 0.0
        %815 = vmatprep.subr.mxu0 0.0
        %816 = vmatpush1.msra.mxu0 0.0
        %817 = vmatprep.subr.mxu0 0.0
        %818 = vmatpush1.msra.mxu0 0.0
        %819 = vmatprep.subr.mxu0 0.0
        %820 = vmatpush1.msra.mxu0 0.0
        %821 = vmatprep.subr.mxu0 0.0
        %822 = vmatpush1.msra.mxu0 0.0
        %823 = vmatprep.subr.mxu0 0.0
        %824 = vmatpush1.msra.mxu0 0.0
        %825 = vmatprep.subr.mxu0 0.0
        %826 = vmatpush1.msra.mxu0 0.0
        %827 = vmatprep.subr.mxu0 0.0
        %828 = vmatpush1.msra.mxu0 0.0
        %829 = vmatprep.subr.mxu0 0.0
        %830 = vmatpush1.msra.mxu0 0.0
        %831 = vmatprep.subr.mxu0 0.0
        %832 = vmatpush1.msra.mxu0 0.0
        %833 = vmatprep.subr.mxu0 0.0
        %834 = vmatpush1.msra.mxu0 0.0
        %835 = vmatprep.subr.mxu0 0.0
        %836 = vmatpush1.msra.mxu0 0.0
        %837 = vmatprep.subr.mxu0 0.0
        %838 = vmatpush1.msra.mxu0 0.0
        %839 = vmatprep.subr.mxu0 0.0
        %840 = vmatpush1.msra.mxu0 0.0
        %841 = vmatprep.subr.mxu0 0.0
        %842 = vmatpush1.msra.mxu0 0.0
        %843 = vmatprep.subr.mxu0 0.0
        %844 = vmatpush1.msra.mxu0 0.0
        %845 = vmatprep.subr.mxu0 0.0
        %846 = vmatpush1.msra.mxu0 0.0
        %847 = vmatprep.subr.mxu0 0.0
        %848 = vmatpush1.msra.mxu0 0.0
        %849 = vmatprep.subr.mxu0 0.0
        %850 = vmatpush1.msra.mxu0 0.0
        %851 = vmatprep.mubr.f32.mxu0 0.0
        %852 = vmatmul.mubr.f32.gmra.mrb[0].mxu0 %v785
        %v853 = vpop.f32.mrb[0].mxu0
        %v854 = vadd.f32 0.0, %v853
        %v855 = vpop.f32.mrb[0].mxu0
        %856 = vdwg.mxu0
        %v858 = vsel %vm453, %v613, 0
        %860 = vmatprep.subr.mxu0 0.0
        %861 = vmatpush1.msra.mxu0 %v616
        %862 = vmatprep.subr.mxu0 0.0
        %863 = vmatpush1.msra.mxu0 0.0
        %864 = vmatprep.subr.mxu0 0.0
        %865 = vmatpush1.msra.mxu0 0.0
        %866 = vmatprep.subr.mxu0 0.0
        %867 = vmatpush1.msra.mxu0 0.0
        %868 = vmatprep.subr.mxu0 0.0
        %869 = vmatpush1.msra.mxu0 0.0
        %870 = vmatprep.subr.mxu0 0.0
        %871 = vmatpush1.msra.mxu0 0.0
        %872 = vmatprep.subr.mxu0 0.0
        %873 = vmatpush1.msra.mxu0 0.0
        %874 = vmatprep.subr.mxu0 0.0
        %875 = vmatpush1.msra.mxu0 0.0
        %876 = vmatprep.subr.mxu0 0.0
        %877 = vmatpush1.msra.mxu0 0.0
        %878 = vmatprep.subr.mxu0 0.0
        %879 = vmatpush1.msra.mxu0 0.0
        %880 = vmatprep.subr.mxu0 0.0
        %881 = vmatpush1.msra.mxu0 0.0
        %882 = vmatprep.subr.mxu0 0.0
        %883 = vmatpush1.msra.mxu0 0.0
        %884 = vmatprep.subr.mxu0 0.0
        %885 = vmatpush1.msra.mxu0 0.0
        %886 = vmatprep.subr.mxu0 0.0
        %887 = vmatpush1.msra.mxu0 0.0
        %888 = vmatprep.subr.mxu0 0.0
        %889 = vmatpush1.msra.mxu0 0.0
        %890 = vmatprep.subr.mxu0 0.0
        %891 = vmatpush1.msra.mxu0 0.0
        %892 = vmatprep.subr.mxu0 0.0
        %893 = vmatpush1.msra.mxu0 0.0
        %894 = vmatprep.subr.mxu0 0.0
        %895 = vmatpush1.msra.mxu0 0.0
        %896 = vmatprep.subr.mxu0 0.0
        %897 = vmatpush1.msra.mxu0 0.0
        %898 = vmatprep.subr.mxu0 0.0
        %899 = vmatpush1.msra.mxu0 0.0
        %900 = vmatprep.subr.mxu0 0.0
        %901 = vmatpush1.msra.mxu0 0.0
        %902 = vmatprep.subr.mxu0 0.0
        %903 = vmatpush1.msra.mxu0 0.0
        %904 = vmatprep.subr.mxu0 0.0
        %905 = vmatpush1.msra.mxu0 0.0
        %906 = vmatprep.subr.mxu0 0.0
        %907 = vmatpush1.msra.mxu0 0.0
        %908 = vmatprep.subr.mxu0 0.0
        %909 = vmatpush1.msra.mxu0 0.0
        %910 = vmatprep.subr.mxu0 0.0
        %911 = vmatpush1.msra.mxu0 0.0
        %912 = vmatprep.subr.mxu0 0.0
        %913 = vmatpush1.msra.mxu0 0.0
        %914 = vmatprep.subr.mxu0 0.0
        %915 = vmatpush1.msra.mxu0 0.0
        %916 = vmatprep.subr.mxu0 0.0
        %917 = vmatpush1.msra.mxu0 0.0
        %918 = vmatprep.subr.mxu0 0.0
        %919 = vmatpush1.msra.mxu0 0.0
        %920 = vmatprep.subr.mxu0 0.0
        %921 = vmatpush1.msra.mxu0 0.0
        %922 = vmatprep.subr.mxu0 0.0
        %923 = vmatpush1.msra.mxu0 0.0
        %924 = vmatprep.mubr.f32.mxu0 0.0
        %925 = vmatmul.mubr.f32.gmra.mrb[0].mxu0 %v858
        %v926 = vpop.f32.mrb[0].mxu0
        %v927 = vadd.f32 %v854, %v926
        %v928 = vpop.f32.mrb[0].mxu0
        %929 = vdwg.mxu0
        %930 = vrot.lane.b32.xlu0 %v447, 112
        %v931 = vpop.permute.xlu0 %930
        %932 = vrot.lane.b32.xlu0 %v447, 80
        %v933 = vpop.permute.xlu0 %932
        %v934 = vsel %vm453, %v931, 0
        %v936 = vsel %vm453, %v933, 0
        %938 = vmatprep.subr.mxu0 0.0
        %939 = vmatpush1.xpose.msra.mxu0 %v936
        %940 = vmatprep.subr.mxu0 0.0
        %941 = vmatpush1.xpose.msra.mxu0 0.0
        %942 = vmatprep.subr.mxu0 0.0
        %943 = vmatpush1.xpose.msra.mxu0 0.0
        %944 = vmatprep.subr.mxu0 0.0
        %945 = vmatpush1.xpose.msra.mxu0 0.0
        %946 = vmatprep.subr.mxu0 0.0
        %947 = vmatpush1.xpose.msra.mxu0 0.0
        %948 = vmatprep.subr.mxu0 0.0
        %949 = vmatpush1.xpose.msra.mxu0 0.0
        %950 = vmatprep.subr.mxu0 0.0
        %951 = vmatpush1.xpose.msra.mxu0 0.0
        %952 = vmatprep.subr.mxu0 0.0
        %953 = vmatpush1.xpose.msra.mxu0 0.0
        %954 = vmatprep.subr.mxu0 0.0
        %955 = vmatpush1.xpose.msra.mxu0 0.0
        %956 = vmatprep.subr.mxu0 0.0
        %957 = vmatpush1.xpose.msra.mxu0 0.0
        %958 = vmatprep.subr.mxu0 0.0
        %959 = vmatpush1.xpose.msra.mxu0 0.0
        %960 = vmatprep.subr.mxu0 0.0
        %961 = vmatpush1.xpose.msra.mxu0 0.0
        %962 = vmatprep.subr.mxu0 0.0
        %963 = vmatpush1.xpose.msra.mxu0 0.0
        %964 = vmatprep.subr.mxu0 0.0
        %965 = vmatpush1.xpose.msra.mxu0 0.0
        %966 = vmatprep.subr.mxu0 0.0
        %967 = vmatpush1.xpose.msra.mxu0 0.0
        %968 = vmatprep.subr.mxu0 0.0
        %969 = vmatpush1.xpose.msra.mxu0 0.0
        %970 = vmatprep.subr.mxu0 0.0
        %971 = vmatpush1.xpose.msra.mxu0 0.0
        %972 = vmatprep.subr.mxu0 0.0
        %973 = vmatpush1.xpose.msra.mxu0 0.0
        %974 = vmatprep.subr.mxu0 0.0
        %975 = vmatpush1.xpose.msra.mxu0 0.0
        %976 = vmatprep.subr.mxu0 0.0
        %977 = vmatpush1.xpose.msra.mxu0 0.0
        %978 = vmatprep.subr.mxu0 0.0
        %979 = vmatpush1.xpose.msra.mxu0 0.0
        %980 = vmatprep.subr.mxu0 0.0
        %981 = vmatpush1.xpose.msra.mxu0 0.0
        %982 = vmatprep.subr.mxu0 0.0
        %983 = vmatpush1.xpose.msra.mxu0 0.0
        %984 = vmatprep.subr.mxu0 0.0
        %985 = vmatpush1.xpose.msra.mxu0 0.0
        %986 = vmatprep.subr.mxu0 0.0
        %987 = vmatpush1.xpose.msra.mxu0 0.0
        %988 = vmatprep.subr.mxu0 0.0
        %989 = vmatpush1.xpose.msra.mxu0 0.0
        %990 = vmatprep.subr.mxu0 0.0
        %991 = vmatpush1.xpose.msra.mxu0 0.0
        %992 = vmatprep.subr.mxu0 0.0
        %993 = vmatpush1.xpose.msra.mxu0 0.0
        %994 = vmatprep.subr.mxu0 0.0
        %995 = vmatpush1.xpose.msra.mxu0 0.0
        %996 = vmatprep.subr.mxu0 0.0
        %997 = vmatpush1.xpose.msra.mxu0 0.0
        %998 = vmatprep.subr.mxu0 0.0
        %999 = vmatpush1.xpose.msra.mxu0 0.0
        %1000 = vmatprep.subr.mxu0 0.0
        %1001 = vmatpush1.xpose.msra.mxu0 0.0
        %1002 = vmatprep.mubr.f32.mxu0 0.0
        %1003 = vmatmul.mubr.f32.gmra.mrb[0].mxu0 %v934
        %v1004 = vpop.f32.mrb[0].mxu0
        %v1005 = vadd.f32 0.0, %v1004
        %v1006 = vpop.f32.mrb[0].mxu0
        %1007 = vdwg.mxu0
        %v1008 = vmul.f32 %v1005, 0.35355338
        %v1009 = vsel %vm453, %v1008, -inf
        %1010 = vmax.xlane.f32.xlu0 %v1009
        %v1011 = vpop.xlane.xlu0 %1010
        %v1012 = vsub.f32 %v1008, %v1011
        %v1013 = vmul.f32 %v1012, 1.442695
        %v1014 = vpow.pop %v1013
        %v1015 = vsel %vm453, %v1014, 0.0
        %1016 = vadd.xlane.f32.xlu0 %v1015
        %v1017 = vpop.xlane.xlu0 %1016
        %v1018 = vrcp.pop %v1017
        %v1019 = vmul.f32 %v1014, %v1018
        %1020 = vrot.lane.b32.xlu0 %v447, 48
        %v1021 = vpop.permute.xlu0 %1020
        %v1024 = vsel %vm453, %v1019, 0
        %1026 = vmatprep.subr.mxu0 0.0
        %1027 = vmatpush1.msra.mxu0 %v1021
        %1028 = vmatprep.subr.mxu0 0.0
        %1029 = vmatpush1.msra.mxu0 0.0
        %1030 = vmatprep.subr.mxu0 0.0
        %1031 = vmatpush1.msra.mxu0 0.0
        %1032 = vmatprep.subr.mxu0 0.0
        %1033 = vmatpush1.msra.mxu0 0.0
        %1034 = vmatprep.subr.mxu0 0.0
        %1035 = vmatpush1.msra.mxu0 0.0
        %1036 = vmatprep.subr.mxu0 0.0
        %1037 = vmatpush1.msra.mxu0 0.0
        %1038 = vmatprep.subr.mxu0 0.0
        %1039 = vmatpush1.msra.mxu0 0.0
        %1040 = vmatprep.subr.mxu0 0.0
        %1041 = vmatpush1.msra.mxu0 0.0
        %1042 = vmatprep.subr.mxu0 0.0
        %1043 = vmatpush1.msra.mxu0 0.0
        %1044 = vmatprep.subr.mxu0 0.0
        %1045 = vmatpush1.msra.mxu0 0.0
        %1046 = vmatprep.subr.mxu0 0.0
        %1047 = vmatpush1.msra.mxu0 0.0
        %1048 = vmatprep.subr.mxu0 0.0
        %1049 = vmatpush1.msra.mxu0 0.0
        %1050 = vmatprep.subr.mxu0 0.0
        %1051 = vmatpush1.msra.mxu0 0.0
        %1052 = vmatprep.subr.mxu0 0.0
        %1053 = vmatpush1.msra.mxu0 0.0
        %1054 = vmatprep.subr.mxu0 0.0
        %1055 = vmatpush1.msra.mxu0 0.0
        %1056 = vmatprep.subr.mxu0 0.0
        %1057 = vmatpush1.msra.mxu0 0.0
        %1058 = vmatprep.subr.mxu0 0.0
        %1059 = vmatpush1.msra.mxu0 0.0
        %1060 = vmatprep.subr.mxu0 0.0
        %1061 = vmatpush1.msra.mxu0 0.0
        %1062 = vmatprep.subr.mxu0 0.0
        %1063 = vmatpush1.msra.mxu0 0.0
        %1064 = vmatprep.subr.mxu0 0.0
        %1065 = vmatpush1.msra.mxu0 0.0
        %1066 = vmatprep.subr.mxu0 0.0
        %1067 = vmatpush1.msra.mxu0 0.0
        %1068 = vmatprep.subr.mxu0 0.0
        %1069 = vmatpush1.msra.mxu0 0.0
        %1070 = vmatprep.subr.mxu0 0.0
        %1071 = vmatpush1.msra.mxu0 0.0
        %1072 = vmatprep.subr.mxu0 0.0
        %1073 = vmatpush1.msra.mxu0 0.0
        %1074 = vmatprep.subr.mxu0 0.0
        %1075 = vmatpush1.msra.mxu0 0.0
        %1076 = vmatprep.subr.mxu0 0.0
        %1077 = vmatpush1.msra.mxu0 0.0
        %1078 = vmatprep.subr.mxu0 0.0
        %1079 = vmatpush1.msra.mxu0 0.0
        %1080 = vmatprep.subr.mxu0 0.0
        %1081 = vmatpush1.msra.mxu0 0.0
        %1082 = vmatprep.subr.mxu0 0.0
        %1083 = vmatpush1.msra.mxu0 0.0
        %1084 = vmatprep.subr.mxu0 0.0
        %1085 = vmatpush1.msra.mxu0 0.0
        %1086 = vmatprep.subr.mxu0 0.0
        %1087 = vmatpush1.msra.mxu0 0.0
        %1088 = vmatprep.subr.mxu0 0.0
        %1089 = vmatpush1.msra.mxu0 0.0
        %1090 = vmatprep.mubr.f32.mxu0 0.0
        %1091 = vmatmul.mubr.f32.gmra.mrb[0].mxu0 %v1024
        %v1092 = vpop.f32.mrb[0].mxu0
        %v1093 = vadd.f32 0.0, %v1092
        %v1094 = vpop.f32.mrb[0].mxu0
        %1095 = vdwg.mxu0
        %v1096 = vld [vmem:[%s3 + $0x10] sm:$0xff]
        %v1098 = vsel %vm453, %v1093, 0
        %1100 = vmatprep.subr.mxu0 0.0
        %1101 = vmatpush1.msra.mxu0 %v1096
        %1102 = vmatprep.subr.mxu0 0.0
        %1103 = vmatpush1.msra.mxu0 0.0
        %1104 = vmatprep.subr.mxu0 0.0
        %1105 = vmatpush1.msra.mxu0 0.0
        %1106 = vmatprep.subr.mxu0 0.0
        %1107 = vmatpush1.msra.mxu0 0.0
        %1108 = vmatprep.subr.mxu0 0.0
        %1109 = vmatpush1.msra.mxu0 0.0
        %1110 = vmatprep.subr.mxu0 0.0
        %1111 = vmatpush1.msra.mxu0 0.0
        %1112 = vmatprep.subr.mxu0 0.0
        %1113 = vmatpush1.msra.mxu0 0.0
        %1114 = vmatprep.subr.mxu0 0.0
        %1115 = vmatpush1.msra.mxu0 0.0
        %1116 = vmatprep.subr.mxu0 0.0
        %1117 = vmatpush1.msra.mxu0 0.0
        %1118 = vmatprep.subr.mxu0 0.0
        %1119 = vmatpush1.msra.mxu0 0.0
        %1120 = vmatprep.subr.mxu0 0.0
        %1121 = vmatpush1.msra.mxu0 0.0
        %1122 = vmatprep.subr.mxu0 0.0
        %1123 = vmatpush1.msra.mxu0 0.0
        %1124 = vmatprep.subr.mxu0 0.0
        %1125 = vmatpush1.msra.mxu0 0.0
        %1126 = vmatprep.subr.mxu0 0.0
        %1127 = vmatpush1.msra.mxu0 0.0
        %1128 = vmatprep.subr.mxu0 0.0
        %1129 = vmatpush1.msra.mxu0 0.0
        %1130 = vmatprep.subr.mxu0 0.0
        %1131 = vmatpush1.msra.mxu0 0.0
        %1132 = vmatprep.subr.mxu0 0.0
        %1133 = vmatpush1.msra.mxu0 0.0
        %1134 = vmatprep.subr.mxu0 0.0
        %1135 = vmatpush1.msra.mxu0 0.0
        %1136 = vmatprep.subr.mxu0 0.0
        %1137 = vmatpush1.msra.mxu0 0.0
        %1138 = vmatprep.subr.mxu0 0.0
        %1139 = vmatpush1.msra.mxu0 0.0
        %1140 = vmatprep.subr.mxu0 0.0
        %1141 = vmatpush1.msra.mxu0 0.0
        %1142 = vmatprep.subr.mxu0 0.0
        %1143 = vmatpush1.msra.mxu0 0.0
        %1144 = vmatprep.subr.mxu0 0.0
        %1145 = vmatpush1.msra.mxu0 0.0
        %1146 = vmatprep.subr.mxu0 0.0
        %1147 = vmatpush1.msra.mxu0 0.0
        %1148 = vmatprep.subr.mxu0 0.0
        %1149 = vmatpush1.msra.mxu0 0.0
        %1150 = vmatprep.subr.mxu0 0.0
        %1151 = vmatpush1.msra.mxu0 0.0
        %1152 = vmatprep.subr.mxu0 0.0
        %1153 = vmatpush1.msra.mxu0 0.0
        %1154 = vmatprep.subr.mxu0 0.0
        %1155 = vmatpush1.msra.mxu0 0.0
        %1156 = vmatprep.subr.mxu0 0.0
        %1157 = vmatpush1.msra.mxu0 0.0
        %1158 = vmatprep.subr.mxu0 0.0
        %1159 = vmatpush1.msra.mxu0 0.0
        %1160 = vmatprep.subr.mxu0 0.0
        %1161 = vmatpush1.msra.mxu0 0.0
        %1162 = vmatprep.subr.mxu0 0.0
        %1163 = vmatpush1.msra.mxu0 0.0
        %1164 = vmatprep.mubr.f32.mxu0 0.0
        %1165 = vmatmul.mubr.f32.gmra.mrb[0].mxu0 %v1098
        %v1166 = vpop.f32.mrb[0].mxu0
        %v1167 = vadd.f32 0.0, %v1166
        %v1168 = vpop.f32.mrb[0].mxu0
        %1169 = vdwg.mxu0
        %v1170 = vadd.f32 %v927, %v1167
        %1171 = vrot.lane.b32.xlu0 %v447, 104
        %v1172 = vpop.permute.xlu0 %1171
        %1173 = vrot.lane.b32.xlu0 %v447, 72
        %v1174 = vpop.permute.xlu0 %1173
        %v1175 = vsel %vm453, %v1172, 0
        %v1177 = vsel %vm453, %v1174, 0
        %1179 = vmatprep.subr.mxu0 0.0
        %1180 = vmatpush1.xpose.msra.mxu0 %v1177
        %1181 = vmatprep.subr.mxu0 0.0
        %1182 = vmatpush1.xpose.msra.mxu0 0.0
        %1183 = vmatprep.subr.mxu0 0.0
        %1184 = vmatpush1.xpose.msra.mxu0 0.0
        %1185 = vmatprep.subr.mxu0 0.0
        %1186 = vmatpush1.xpose.msra.mxu0 0.0
        %1187 = vmatprep.subr.mxu0 0.0
        %1188 = vmatpush1.xpose.msra.mxu0 0.0
        %1189 = vmatprep.subr.mxu0 0.0
        %1190 = vmatpush1.xpose.msra.mxu0 0.0
        %1191 = vmatprep.subr.mxu0 0.0
        %1192 = vmatpush1.xpose.msra.mxu0 0.0
        %1193 = vmatprep.subr.mxu0 0.0
        %1194 = vmatpush1.xpose.msra.mxu0 0.0
        %1195 = vmatprep.subr.mxu0 0.0
        %1196 = vmatpush1.xpose.msra.mxu0 0.0
        %1197 = vmatprep.subr.mxu0 0.0
        %1198 = vmatpush1.xpose.msra.mxu0 0.0
        %1199 = vmatprep.subr.mxu0 0.0
        %1200 = vmatpush1.xpose.msra.mxu0 0.0
        %1201 = vmatprep.subr.mxu0 0.0
        %1202 = vmatpush1.xpose.msra.mxu0 0.0
        %1203 = vmatprep.subr.mxu0 0.0
        %1204 = vmatpush1.xpose.msra.mxu0 0.0
        %1205 = vmatprep.subr.mxu0 0.0
        %1206 = vmatpush1.xpose.msra.mxu0 0.0
        %1207 = vmatprep.subr.mxu0 0.0
        %1208 = vmatpush1.xpose.msra.mxu0 0.0
        %1209 = vmatprep.subr.mxu0 0.0
        %1210 = vmatpush1.xpose.msra.mxu0 0.0
        %1211 = vmatprep.subr.mxu0 0.0
        %1212 = vmatpush1.xpose.msra.mxu0 0.0
        %1213 = vmatprep.subr.mxu0 0.0
        %1214 = vmatpush1.xpose.msra.mxu0 0.0
        %1215 = vmatprep.subr.mxu0 0.0
        %1216 = vmatpush1.xpose.msra.mxu0 0.0
        %1217 = vmatprep.subr.mxu0 0.0
        %1218 = vmatpush1.xpose.msra.mxu0 0.0
        %1219 = vmatprep.subr.mxu0 0.0
        %1220 = vmatpush1.xpose.msra.mxu0 0.0
        %1221 = vmatprep.subr.mxu0 0.0
        %1222 = vmatpush1.xpose.msra.mxu0 0.0
        %1223 = vmatprep.subr.mxu0 0.0
        %1224 = vmatpush1.xpose.msra.mxu0 0.0
        %1225 = vmatprep.subr.mxu0 0.0
        %1226 = vmatpush1.xpose.msra.mxu0 0.0
        %1227 = vmatprep.subr.mxu0 0.0
        %1228 = vmatpush1.xpose.msra.mxu0 0.0
        %1229 = vmatprep.subr.mxu0 0.0
        %1230 = vmatpush1.xpose.msra.mxu0 0.0
        %1231 = vmatprep.subr.mxu0 0.0
        %1232 = vmatpush1.xpose.msra.mxu0 0.0
        %1233 = vmatprep.subr.mxu0 0.0
        %1234 = vmatpush1.xpose.msra.mxu0 0.0
        %1235 = vmatprep.subr.mxu0 0.0
        %1236 = vmatpush1.xpose.msra.mxu0 0.0
        %1237 = vmatprep.subr.mxu0 0.0
        %1238 = vmatpush1.xpose.msra.mxu0 0.0
        %1239 = vmatprep.subr.mxu0 0.0
        %1240 = vmatpush1.xpose.msra.mxu0 0.0
        %1241 = vmatprep.subr.mxu0 0.0
        %1242 = vmatpush1.xpose.msra.mxu0 0.0
        %1243 = vmatprep.mubr.f32.mxu0 0.0
        %1244 = vmatmul.mubr.f32.gmra.mrb[0].mxu0 %v1175
        %v1245 = vpop.f32.mrb[0].mxu0
        %v1246 = vadd.f32 0.0, %v1245
        %v1247 = vpop.f32.mrb[0].mxu0
        %1248 = vdwg.mxu0
        %v1249 = vmul.f32 %v1246, 0.35355338
        %v1250 = vsel %vm453, %v1249, -inf
        %1251 = vmax.xlane.f32.xlu0 %v1250
        %v1252 = vpop.xlane.xlu0 %1251
        %v1253 = vsub.f32 %v1249, %v1252
        %v1254 = vmul.f32 %v1253, 1.442695
        %v1255 = vpow.pop %v1254
        %v1256 = vsel %vm453, %v1255, 0.0
        %1257 = vadd.xlane.f32.xlu0 %v1256
        %v1258 = vpop.xlane.xlu0 %1257
        %v1259 = vrcp.pop %v1258
        %v1260 = vmul.f32 %v1255, %v1259
        %1261 = vrot.lane.b32.xlu0 %v447, 40
        %v1262 = vpop.permute.xlu0 %1261
        %v1265 = vsel %vm453, %v1260, 0
        %1267 = vmatprep.subr.mxu0 0.0
        %1268 = vmatpush1.msra.mxu0 %v1262
        %1269 = vmatprep.subr.mxu0 0.0
        %1270 = vmatpush1.msra.mxu0 0.0
        %1271 = vmatprep.subr.mxu0 0.0
        %1272 = vmatpush1.msra.mxu0 0.0
        %1273 = vmatprep.subr.mxu0 0.0
        %1274 = vmatpush1.msra.mxu0 0.0
        %1275 = vmatprep.subr.mxu0 0.0
        %1276 = vmatpush1.msra.mxu0 0.0
        %1277 = vmatprep.subr.mxu0 0.0
        %1278 = vmatpush1.msra.mxu0 0.0
        %1279 = vmatprep.subr.mxu0 0.0
        %1280 = vmatpush1.msra.mxu0 0.0
        %1281 = vmatprep.subr.mxu0 0.0
        %1282 = vmatpush1.msra.mxu0 0.0
        %1283 = vmatprep.subr.mxu0 0.0
        %1284 = vmatpush1.msra.mxu0 0.0
        %1285 = vmatprep.subr.mxu0 0.0
        %1286 = vmatpush1.msra.mxu0 0.0
        %1287 = vmatprep.subr.mxu0 0.0
        %1288 = vmatpush1.msra.mxu0 0.0
        %1289 = vmatprep.subr.mxu0 0.0
        %1290 = vmatpush1.msra.mxu0 0.0
        %1291 = vmatprep.subr.mxu0 0.0
        %1292 = vmatpush1.msra.mxu0 0.0
        %1293 = vmatprep.subr.mxu0 0.0
        %1294 = vmatpush1.msra.mxu0 0.0
        %1295 = vmatprep.subr.mxu0 0.0
        %1296 = vmatpush1.msra.mxu0 0.0
        %1297 = vmatprep.subr.mxu0 0.0
        %1298 = vmatpush1.msra.mxu0 0.0
        %1299 = vmatprep.subr.mxu0 0.0
        %1300 = vmatpush1.msra.mxu0 0.0
        %1301 = vmatprep.subr.mxu0 0.0
        %1302 = vmatpush1.msra.mxu0 0.0
        %1303 = vmatprep.subr.mxu0 0.0
        %1304 = vmatpush1.msra.mxu0 0.0
        %1305 = vmatprep.subr.mxu0 0.0
        %1306 = vmatpush1.msra.mxu0 0.0
        %1307 = vmatprep.subr.mxu0 0.0
        %1308 = vmatpush1.msra.mxu0 0.0
        %1309 = vmatprep.subr.mxu0 0.0
        %1310 = vmatpush1.msra.mxu0 0.0
        %1311 = vmatprep.subr.mxu0 0.0
        %1312 = vmatpush1.msra.mxu0 0.0
        %1313 = vmatprep.subr.mxu0 0.0
        %1314 = vmatpush1.msra.mxu0 0.0
        %1315 = vmatprep.subr.mxu0 0.0
        %1316 = vmatpush1.msra.mxu0 0.0
        %1317 = vmatprep.subr.mxu0 0.0
        %1318 = vmatpush1.msra.mxu0 0.0
        %1319 = vmatprep.subr.mxu0 0.0
        %1320 = vmatpush1.msra.mxu0 0.0
        %1321 = vmatprep.subr.mxu0 0.0
        %1322 = vmatpush1.msra.mxu0 0.0
        %1323 = vmatprep.subr.mxu0 0.0
        %1324 = vmatpush1.msra.mxu0 0.0
        %1325 = vmatprep.subr.mxu0 0.0
        %1326 = vmatpush1.msra.mxu0 0.0
        %1327 = vmatprep.subr.mxu0 0.0
        %1328 = vmatpush1.msra.mxu0 0.0
        %1329 = vmatprep.subr.mxu0 0.0
        %1330 = vmatpush1.msra.mxu0 0.0
        %1331 = vmatprep.mubr.f32.mxu0 0.0
        %1332 = vmatmul.mubr.f32.gmra.mrb[0].mxu0 %v1265
        %v1333 = vpop.f32.mrb[0].mxu0
        %v1334 = vadd.f32 0.0, %v1333
        %v1335 = vpop.f32.mrb[0].mxu0
        %1336 = vdwg.mxu0
        %v1337 = vld [vmem:[%s3 + $0x18] sm:$0xff]
        %v1339 = vsel %vm453, %v1334, 0
        %1341 = vmatprep.subr.mxu0 0.0
        %1342 = vmatpush1.msra.mxu0 %v1337
        %1343 = vmatprep.subr.mxu0 0.0
        %1344 = vmatpush1.msra.mxu0 0.0
        %1345 = vmatprep.subr.mxu0 0.0
        %1346 = vmatpush1.msra.mxu0 0.0
        %1347 = vmatprep.subr.mxu0 0.0
        %1348 = vmatpush1.msra.mxu0 0.0
        %1349 = vmatprep.subr.mxu0 0.0
        %1350 = vmatpush1.msra.mxu0 0.0
        %1351 = vmatprep.subr.mxu0 0.0
        %1352 = vmatpush1.msra.mxu0 0.0
        %1353 = vmatprep.subr.mxu0 0.0
        %1354 = vmatpush1.msra.mxu0 0.0
        %1355 = vmatprep.subr.mxu0 0.0
        %1356 = vmatpush1.msra.mxu0 0.0
        %1357 = vmatprep.subr.mxu0 0.0
        %1358 = vmatpush1.msra.mxu0 0.0
        %1359 = vmatprep.subr.mxu0 0.0
        %1360 = vmatpush1.msra.mxu0 0.0
        %1361 = vmatprep.subr.mxu0 0.0
        %1362 = vmatpush1.msra.mxu0 0.0
        %1363 = vmatprep.subr.mxu0 0.0
        %1364 = vmatpush1.msra.mxu0 0.0
        %1365 = vmatprep.subr.mxu0 0.0
        %1366 = vmatpush1.msra.mxu0 0.0
        %1367 = vmatprep.subr.mxu0 0.0
        %1368 = vmatpush1.msra.mxu0 0.0
        %1369 = vmatprep.subr.mxu0 0.0
        %1370 = vmatpush1.msra.mxu0 0.0
        %1371 = vmatprep.subr.mxu0 0.0
        %1372 = vmatpush1.msra.mxu0 0.0
        %1373 = vmatprep.subr.mxu0 0.0
        %1374 = vmatpush1.msra.mxu0 0.0
        %1375 = vmatprep.subr.mxu0 0.0
        %1376 = vmatpush1.msra.mxu0 0.0
        %1377 = vmatprep.subr.mxu0 0.0
        %1378 = vmatpush1.msra.mxu0 0.0
        %1379 = vmatprep.subr.mxu0 0.0
        %1380 = vmatpush1.msra.mxu0 0.0
        %1381 = vmatprep.subr.mxu0 0.0
        %1382 = vmatpush1.msra.mxu0 0.0
        %1383 = vmatprep.subr.mxu0 0.0
        %1384 = vmatpush1.msra.mxu0 0.0
        %1385 = vmatprep.subr.mxu0 0.0
        %1386 = vmatpush1.msra.mxu0 0.0
        %1387 = vmatprep.subr.mxu0 0.0
        %1388 = vmatpush1.msra.mxu0 0.0
        %1389 = vmatprep.subr.mxu0 0.0
        %1390 = vmatpush1.msra.mxu0 0.0
        %1391 = vmatprep.subr.mxu0 0.0
        %1392 = vmatpush1.msra.mxu0 0.0
        %1393 = vmatprep.subr.mxu0 0.0
        %1394 = vmatpush1.msra.mxu0 0.0
        %1395 = vmatprep.subr.mxu0 0.0
        %1396 = vmatpush1.msra.mxu0 0.0
        %1397 = vmatprep.subr.mxu0 0.0
        %1398 = vmatpush1.msra.mxu0 0.0
        %1399 = vmatprep.subr.mxu0 0.0
        %1400 = vmatpush1.msra.mxu0 0.0
        %1401 = vmatprep.subr.mxu0 0.0
        %1402 = vmatpush1.msra.mxu0 0.0
        %1403 = vmatprep.subr.mxu0 0.0
        %1404 = vmatpush1.msra.mxu0 0.0
        %1405 = vmatprep.mubr.f32.mxu0 0.0
        %1406 = vmatmul.mubr.f32.gmra.mrb[0].mxu0 %v1339
        %v1407 = vpop.f32.mrb[0].mxu0
        %v1408 = vadd.f32 0.0, %v1407
        %v1409 = vpop.f32.mrb[0].mxu0
        %1410 = vdwg.mxu0
        %v1411 = vadd.f32 %v1170, %v1408
        %v1412 = vadd.f32 %v348, %v1411
        %v1413 = vld [vmem:[%s4] sm:$0x1]
        %v1415 = vlaneseq
        %v1416 = vshrl.u32 %v1415, 7
        %v1417 = vsub.s32 0, %v1416
        %v1418 = vrot.slane %v1413, %v1417
        %v1420 = vadd.f32 %v1412, %v1418
        %v1421 = vld [vmem:[%s5] sm:$0xff]
        %v1422 = vld [vmem:[%s5 + $0x8] sm:$0xff]
        %v1423 = vld [vmem:[%s5 + $0x10] sm:$0xff]
        %v1424 = vld [vmem:[%s5 + $0x18] sm:$0xff]
        %v1425 = vld [vmem:[%s6] sm:$0x1]
        %v1427 = vlaneseq
        %v1428 = vshrl.u32 %v1427, 7
        %v1429 = vsub.s32 0, %v1428
        %v1430 = vrot.slane %v1425, %v1429
        %1432 = vmatprep.subr.mxu0 0.0
        %1433 = vmatpush1.msra.mxu0 %v1421
        %1434 = vmatprep.subr.mxu0 0.0
        %1435 = vmatpush1.msra.mxu0 %v1422
        %1436 = vmatprep.subr.mxu0 0.0
        %1437 = vmatpush1.msra.mxu0 %v1423
        %1438 = vmatprep.subr.mxu0 0.0
        %1439 = vmatpush1.msra.mxu0 %v1424
        %1440 = vmatprep.subr.mxu0 0.0
        %1441 = vmatpush1.msra.mxu0 0.0
        %1442 = vmatprep.subr.mxu0 0.0
        %1443 = vmatpush1.msra.mxu0 0.0
        %1444 = vmatprep.subr.mxu0 0.0
        %1445 = vmatpush1.msra.mxu0 0.0
        %1446 = vmatprep.subr.mxu0 0.0
        %1447 = vmatpush1.msra.mxu0 0.0
        %1448 = vmatprep.subr.mxu0 0.0
        %1449 = vmatpush1.msra.mxu0 0.0
        %1450 = vmatprep.subr.mxu0 0.0
        %1451 = vmatpush1.msra.mxu0 0.0
        %1452 = vmatprep.subr.mxu0 0.0
        %1453 = vmatpush1.msra.mxu0 0.0
        %1454 = vmatprep.subr.mxu0 0.0
        %1455 = vmatpush1.msra.mxu0 0.0
        %1456 = vmatprep.subr.mxu0 0.0
        %1457 = vmatpush1.msra.mxu0 0.0
        %1458 = vmatprep.subr.mxu0 0.0
        %1459 = vmatpush1.msra.mxu0 0.0
        %1460 = vmatprep.subr.mxu0 0.0
        %1461 = vmatpush1.msra.mxu0 0.0
        %1462 = vmatprep.subr.mxu0 0.0
        %1463 = vmatpush1.msra.mxu0 0.0
        %1464 = vmatprep.subr.mxu0 0.0
        %1465 = vmatpush1.msra.mxu0 0.0
        %1466 = vmatprep.subr.mxu0 0.0
        %1467 = vmatpush1.msra.mxu0 0.0
        %1468 = vmatprep.subr.mxu0 0.0
        %1469 = vmatpush1.msra.mxu0 0.0
        %1470 = vmatprep.subr.mxu0 0.0
        %1471 = vmatpush1.msra.mxu0 0.0
        %1472 = vmatprep.subr.mxu0 0.0
        %1473 = vmatpush1.msra.mxu0 0.0
        %1474 = vmatprep.subr.mxu0 0.0
        %1475 = vmatpush1.msra.mxu0 0.0
        %1476 = vmatprep.subr.mxu0 0.0
        %1477 = vmatpush1.msra.mxu0 0.0
        %1478 = vmatprep.subr.mxu0 0.0
        %1479 = vmatpush1.msra.mxu0 0.0
        %1480 = vmatprep.subr.mxu0 0.0
        %1481 = vmatpush1.msra.mxu0 0.0
        %1482 = vmatprep.subr.mxu0 0.0
        %1483 = vmatpush1.msra.mxu0 0.0
        %1484 = vmatprep.subr.mxu0 0.0
        %1485 = vmatpush1.msra.mxu0 0.0
        %1486 = vmatprep.subr.mxu0 0.0
        %1487 = vmatpush1.msra.mxu0 0.0
        %1488 = vmatprep.subr.mxu0 0.0
        %1489 = vmatpush1.msra.mxu0 0.0
        %1490 = vmatprep.subr.mxu0 0.0
        %1491 = vmatpush1.msra.mxu0 0.0
        %1492 = vmatprep.subr.mxu0 0.0
        %1493 = vmatpush1.msra.mxu0 0.0
        %1494 = vmatprep.subr.mxu0 0.0
        %1495 = vmatpush1.msra.mxu0 0.0
        %1496 = vmatprep.mubr.f32.mxu0 0.0
        %1497 = vmatmul.mubr.f32.gmra.mrb[0].mxu0 %v378
        %v1498 = vpop.f32.mrb[0].mxu0
        %v1499 = vadd.f32 %v1430, %v1498
        %v1500 = vpop.f32.mrb[0].mxu0
        %1501 = vdwg.mxu0
        %v1502 = vmul.f32 %v1499, 0.5
        %v1503 = vmul.f32 %v1499, 0.044715
        %v1504 = vmul.f32 %v1503, %v1499
        %v1505 = vmul.f32 %v1504, %v1499
        %v1506 = vadd.f32 %v1499, %v1505
        %v1507 = vmul.f32 %v1506, 0.7978846
        %v1508 = vtanh.pop %v1507
        %v1509 = vadd.f32 %v1508, 1.0
        %v1510 = vmul.f32 %v1502, %v1509
        %v1511 = vld [vmem:[%s7] sm:$0xff]
        %v1512 = vld [vmem:[%s7 + $0x8] sm:$0xff]
        %v1513 = vld [vmem:[%s7 + $0x10] sm:$0xff]
        %v1514 = vld [vmem:[%s7 + $0x18] sm:$0xff]
        %v1515 = vld [vmem:[%s7 + $0x20] sm:$0xff]
        %v1516 = vld [vmem:[%s7 + $0x28] sm:$0xff]
        %v1517 = vld [vmem:[%s7 + $0x30] sm:$0xff]
        %v1518 = vld [vmem:[%s7 + $0x38] sm:$0xff]
        %v1519 = vld [vmem:[%s8] sm:$0x1]
        %v1521 = vlaneseq
        %v1522 = vshrl.u32 %v1521, 7
        %v1523 = vsub.s32 0, %v1522
        %v1524 = vrot.slane %v1519, %v1523
        %vm1526 = vcmask 523264
        %v1528 = vsel %vm1526, %v1510, 0
        %1530 = vmatprep.subr.mxu0 0.0
        %1531 = vmatpush1.msra.mxu0 %v1511
        %1532 = vmatprep.subr.mxu0 0.0
        %1533 = vmatpush1.msra.mxu0 %v1512
        %1534 = vmatprep.subr.mxu0 0.0
        %1535 = vmatpush1.msra.mxu0 %v1513
        %1536 = vmatprep.subr.mxu0 0.0
        %1537 = vmatpush1.msra.mxu0 %v1514
        %1538 = vmatprep.subr.mxu0 0.0
        %1539 = vmatpush1.msra.mxu0 %v1515
        %1540 = vmatprep.subr.mxu0 0.0
        %1541 = vmatpush1.msra.mxu0 %v1516
        %1542 = vmatprep.subr.mxu0 0.0
        %1543 = vmatpush1.msra.mxu0 %v1517
        %1544 = vmatprep.subr.mxu0 0.0
        %1545 = vmatpush1.msra.mxu0 %v1518
        %1546 = vmatprep.subr.mxu0 0.0
        %1547 = vmatpush1.msra.mxu0 0.0
        %1548 = vmatprep.subr.mxu0 0.0
        %1549 = vmatpush1.msra.mxu0 0.0
        %1550 = vmatprep.subr.mxu0 0.0
        %1551 = vmatpush1.msra.mxu0 0.0
        %1552 = vmatprep.subr.mxu0 0.0
        %1553 = vmatpush1.msra.mxu0 0.0
        %1554 = vmatprep.subr.mxu0 0.0
        %1555 = vmatpush1.msra.mxu0 0.0
        %1556 = vmatprep.subr.mxu0 0.0
        %1557 = vmatpush1.msra.mxu0 0.0
        %1558 = vmatprep.subr.mxu0 0.0
        %1559 = vmatpush1.msra.mxu0 0.0
        %1560 = vmatprep.subr.mxu0 0.0
        %1561 = vmatpush1.msra.mxu0 0.0
        %1562 = vmatprep.subr.mxu0 0.0
        %1563 = vmatpush1.msra.mxu0 0.0
        %1564 = vmatprep.subr.mxu0 0.0
        %1565 = vmatpush1.msra.mxu0 0.0
        %1566 = vmatprep.subr.mxu0 0.0
        %1567 = vmatpush1.msra.mxu0 0.0
        %1568 = vmatprep.subr.mxu0 0.0
        %1569 = vmatpush1.msra.mxu0 0.0
        %1570 = vmatprep.subr.mxu0 0.0
        %1571 = vmatpush1.msra.mxu0 0.0
        %1572 = vmatprep.subr.mxu0 0.0
        %1573 = vmatpush1.msra.mxu0 0.0
        %1574 = vmatprep.subr.mxu0 0.0
        %1575 = vmatpush1.msra.mxu0 0.0
        %1576 = vmatprep.subr.mxu0 0.0
        %1577 = vmatpush1.msra.mxu0 0.0
        %1578 = vmatprep.subr.mxu0 0.0
        %1579 = vmatpush1.msra.mxu0 0.0
        %1580 = vmatprep.subr.mxu0 0.0
        %1581 = vmatpush1.msra.mxu0 0.0
        %1582 = vmatprep.subr.mxu0 0.0
        %1583 = vmatpush1.msra.mxu0 0.0
        %1584 = vmatprep.subr.mxu0 0.0
        %1585 = vmatpush1.msra.mxu0 0.0
        %1586 = vmatprep.subr.mxu0 0.0
        %1587 = vmatpush1.msra.mxu0 0.0
        %1588 = vmatprep.subr.mxu0 0.0
        %1589 = vmatpush1.msra.mxu0 0.0
        %1590 = vmatprep.subr.mxu0 0.0
        %1591 = vmatpush1.msra.mxu0 0.0
        %1592 = vmatprep.subr.mxu0 0.0
        %1593 = vmatpush1.msra.mxu0 0.0
        %1594 = vmatprep.mubr.f32.mxu0 0.0
        %1595 = vmatmul.mubr.f32.gmra.mrb[0].mxu0 %v1528
        %v1596 = vpop.f32.mrb[0].mxu0
        %v1597 = vadd.f32 %v1524, %v1596
        %v1598 = vpop.f32.mrb[0].mxu0
        %1599 = vdwg.mxu0
        %v1600 = vadd.f32 %v1420, %v1597
        %1601 = vst.msk [vmem:[%s347] sm:$0xff] %vm349, %v1600
        %s1602 = sand.u32 %s228, 1
        %s1603 = scalar_lea.sflag [#allocation4], %s1602
        %s1604 = sand.u32 %s228, 1
        %s1605 = smul.addr %s1604, 8
        %s1606 = scalar_lea.vmem [#allocation5], %s1605
        // Predicated region
        $region61: #{tpu_custom_call.1} parent=55 // pred_check
          %p1607 = pneg %p238
        $region62: #{tpu_custom_call.1} parent=55 // pred_check_branch
          %1609 = sbr.rel (%p1607) target = $region64
        $region63: #{tpu_custom_call.1} parent=55 // pred_region
          %s1611 = ssub.s32 128, 128
          %1612 = vsyncadd %s1603, %s1611
          %s1613 = smul.addr %s26, 128
          %s1614 = scalar_lea.hbm %s9, %s1613
          %s1616 = sshll.u32 %s1606, 4
          %s1617 = int_to_ptr.vmem [resolvable:$true] %s1616
          %1619 = dma.vmem_to_hbm [thread:$0]  %s1617, 128, %s1614, %s1603
        $region64: #{tpu_custom_call.1} parent=55 // pred_fallthru
          _
      $region56: #{tpu_custom_call.1} parent=5 // pred_fallthru
        _
      %p1620 = scmp.le.s32.totalorder 2, %s21
      // Predicated region
      $region65: #{tpu_custom_call.1} parent=5 // pred_check
        %p1621 = pneg %p1620
      $region66: #{tpu_custom_call.1} parent=5 // pred_check_branch
        %1623 = sbr.rel (%p1621) target = $region68
      $region67: #{tpu_custom_call.1} parent=5 // pred_region
        %s1624 = ssub.s32 %s21, 2
        // Predicated region
        $region69: #{tpu_custom_call.1} parent=67 // pred_check
          %p1625 = pneg %p244
        $region70: #{tpu_custom_call.1} parent=67 // pred_check_branch
          %1627 = sbr.rel (%p1625) target = $region72
        $region71: #{tpu_custom_call.1} parent=67 // pred_region
          %s1628 = sand.u32 %s229, 1
          %s1629 = scalar_lea.sflag [#allocation4], %s1628
          %s1630 = sand.u32 %s229, 1
          %s1631 = smul.addr %s1630, 8
          %s1632 = scalar_lea.vmem [#allocation5], %s1631
          %1633 = dma.done %s1629, 128
        $region72: #{tpu_custom_call.1} parent=67 // pred_fallthru
          _
      $region68: #{tpu_custom_call.1} parent=5 // pred_fallthru
        _
    $region6: #{tpu_custom_call.1} parent=1 // loop_footer
      %s25 = sadd.s32 1, %s21
    $region7: #{tpu_custom_call.1} parent=1 // loop_footer_branch
      %20 = sbr.rel target = $region3
    $region8: #{tpu_custom_call.1} parent=1 // loop_exit
      _
    %1634 = vsyncpa [#allocation3], 1
    %s1635 = scalar_lea.sflag [#allocation3], 1
    %1636 = vsyncpa %s1635, 1
    %1637 = vsyncpa [#allocation4], 1
    %s1638 = scalar_lea.sflag [#allocation4], 1
    %1639 = vsyncpa %s1638, 1

</llo_original>
